<compile_context>
chip_gen: v5e
topology: v5e:2x2
jax: 0.10.0
libtpu: 0.0.40
codegen_flags: <defaults>
</compile_context>

<pallas_src>
import functools
import math

import jax
import jax.numpy as jnp
import numpy as np
from jax.experimental import pallas as pl
from jax.experimental.pallas import tpu as pltpu

EPS = 1e-6  # Norm eps from the reference module


def _norm(v, alpha, bias):
    """Matches the PyTorch Norm: alpha * (x - mean) / (std + eps) + bias, unbiased std.

    Exact reciprocal (no approx) -- norm statistics feed everything downstream.
    """
    D = v.shape[-1]
    mean = jnp.mean(v, axis=-1, keepdims=True)
    var = jnp.sum((v - mean) ** 2, axis=-1, keepdims=True) / (D - 1)  # torch .std() is unbiased
    return alpha * (v - mean) / (jnp.sqrt(var) + EPS) + bias


def encoder_layer_kernel(x_ref, mask_ref, n1a_ref, n1b_ref,
                         wqkv_ref, bqkv_ref, wo_ref, bo_ref,
                         n2a_ref, n2b_ref,
                         w1_ref, b1_ref, w2_ref, b2_ref,
                         out_ref,
                         x2b_ref, acc_ref, *, heads, batch, seq):
    f = pl.program_id(0)
    nf = pl.num_programs(0)

    # ---------- f == 0: norm_1 + multi-head attention + residual; norm_2 ----------
    @pl.when(f == 0)
    def _attention():
        x = x_ref[...]                               # (M, D) f32, M = batch*seq
        M, D = x.shape
        dk = D // heads
        scale = 1.0 / math.sqrt(dk)

        x2 = _norm(x, n1a_ref[...], n1b_ref[...])

        # Fused, unpadded QKV projection over ALL batch*seq rows at once.
        qkv = jnp.dot(x2.astype(jnp.bfloat16), wqkv_ref[...],
                      preferred_element_type=jnp.float32) + bqkv_ref[...]
        # Cast to bf16 right after the bias add; fold 1/sqrt(dk) into Q once.
        q = (qkv[:, 0 * D:1 * D] * scale).astype(jnp.bfloat16)
        k = qkv[:, 1 * D:2 * D].astype(jnp.bfloat16)
        v = qkv[:, 2 * D:3 * D].astype(jnp.bfloat16)

        batch_outs = []
        for b in range(batch):                       # static & small -> unrolled
            # Hoisted mask compare + broadcast (1 = attend, 0 = masked keys).
            km = jnp.broadcast_to(mask_ref[b] == 0, (seq, seq))
            r0, r1 = b * seq, (b + 1) * seq
            head_outs = []
            for h in range(heads):                   # static & small -> unrolled
                c0, c1 = h * dk, (h + 1) * dk
                qh = q[r0:r1, c0:c1]
                kh = k[r0:r1, c0:c1]
                vh = v[r0:r1, c0:c1]

                s = jax.lax.dot_general(             # Q @ K^T, (S, S), f32 accumulate
                    qh, kh, (((1,), (1,)), ((), ())),
                    preferred_element_type=jnp.float32)
                s = jnp.where(km, -1e9, s)           # masked_fill(mask == 0, -1e9)

                m = jnp.max(s, axis=-1, keepdims=True)
                e = jnp.exp(s - m)
                p = e * pl.reciprocal(jnp.sum(e, axis=-1, keepdims=True), approx=True)

                head_outs.append(jnp.dot(p.astype(jnp.bfloat16), vh,
                                         preferred_element_type=jnp.float32))
            batch_outs.append(jnp.concatenate(head_outs, axis=-1))      # (S, D)
        concat = jnp.concatenate(batch_outs, axis=0)                    # (M, D)

        # ONE output-projection matmul over the full concat (K = D), then residual 1.
        attn = jnp.dot(concat.astype(jnp.bfloat16), wo_ref[...],
                       preferred_element_type=jnp.float32) + bo_ref[...]
        x_mid = x + attn

        # Seed the FF accumulator with residual + final bias -> finalize is a copy.
        acc_ref[...] = x_mid + b2_ref[...]
        # Keep the normed FF input in bf16 (cast once) for the hot streamed loop.
        x2b_ref[...] = _norm(x_mid, n2a_ref[...], n2b_ref[...]).astype(jnp.bfloat16)

    # ---------- every step: one streamed d_ff chunk of the feed-forward ----------
    h1 = jnp.dot(x2b_ref[...], w1_ref[...],
                 preferred_element_type=jnp.float32) + b1_ref[...]
    h1 = jnp.maximum(h1, 0.0)
    acc_ref[...] += jnp.dot(h1.astype(jnp.bfloat16), w2_ref[...],
                            preferred_element_type=jnp.float32)

    # ---------- last step: write output (residual + bias already in acc) ----------
    @pl.when(f == nf - 1)
    def _finalize():
        out_ref[...] = acc_ref[...]


def encoder_layer(x, mask, params, heads, ff_chunk=1024):
    B, S, D = x.shape
    M = B * S
    d_ff = params["w1"].shape[1]
    tk = min(ff_chunk, d_ff)
    assert d_ff % tk == 0 and tk % 128 == 0, "d_ff chunk must be a 128-multiple divisor of d_ff"
    n_ff = d_ff // tk

    # Fused, UNPADDED QKV weight/bias: plain [Q | K | V] concatenation.
    wqkv = jnp.concatenate([params["wq"], params["wk"], params["wv"]],
                           axis=1).astype(jnp.bfloat16)                 # (D, 3D)
    bqkv = jnp.concatenate([params["bq"], params["bk"], params["bv"]],
                           axis=1).astype(jnp.float32)                  # (1, 3D)
    wo = params["wo"].astype(jnp.bfloat16)
    w1 = params["w1"].astype(jnp.bfloat16)
    w2 = params["w2"].astype(jnp.bfloat16)

    x_flat = x.reshape(M, D)

    def fixed2d(shape):
        return pl.BlockSpec(shape, lambda f: (0, 0))

    in_specs = [
        pl.BlockSpec((M, D), lambda f: (0, 0)),            # x (batch folded into M)
        pl.BlockSpec((B, 1, S), lambda f: (0, 0, 0)),      # mask
        fixed2d((1, D)), fixed2d((1, D)),                  # norm_1 alpha, bias
        fixed2d((D, 3 * D)), fixed2d((1, 3 * D)),          # fused Wqkv, bqkv
        fixed2d((D, D)), fixed2d((1, D)),                  # Wo, bo
        fixed2d((1, D)), fixed2d((1, D)),                  # norm_2 alpha, bias
        pl.BlockSpec((D, tk), lambda f: (0, f)),           # W1 chunk (streamed ONCE)
        pl.BlockSpec((1, tk), lambda f: (0, f)),           # b1 chunk
        pl.BlockSpec((tk, D), lambda f: (f, 0)),           # W2 chunk (streamed ONCE)
        fixed2d((1, D)),                                   # b2
    ]

    dk = D // heads
    flops = (2 * M * D * 3 * D                 # fused QKV projection
             + 2 * B * heads * S * S * dk * 2  # QK^T + PV
             + 2 * M * D * D                   # output projection
             + 2 * M * D * d_ff * 2)           # feed-forward
    bytes_accessed = (2 * M * D * 4 + mask.size * 4
                      + (wqkv.size + wo.size + w1.size + w2.size) * 2    # bf16, streamed once
                      + (bqkv.size + 6 * D + d_ff) * 4)
    cost = pl.CostEstimate(flops=flops,
                           transcendentals=B * heads * S * S + 2 * M,
                           bytes_accessed=bytes_accessed)

    kernel = functools.partial(encoder_layer_kernel, heads=heads, batch=B, seq=S)
    out_flat = pl.pallas_call(
        kernel,
        out_shape=jax.ShapeDtypeStruct((M, D), jnp.float32),
        grid=(n_ff,),
        in_specs=in_specs,
        out_specs=pl.BlockSpec((M, D), lambda f: (0, 0)),
        scratch_shapes=[pltpu.VMEM((M, D), jnp.bfloat16),   # norm_2(x_mid), bf16
                        pltpu.VMEM((M, D), jnp.float32)],   # FF accumulator (+res +b2)
        compiler_params=pltpu.CompilerParams(
            dimension_semantics=("arbitrary",),
            vmem_limit_bytes=64 * 1024 * 1024),
        cost_estimate=cost,
    )(x_flat, mask,
      params["n1a"], params["n1b"],
      wqkv, bqkv, wo, params["bo"],
      params["n2a"], params["n2b"],
      w1, params["b1"], w2, params["b2"])
    return out_flat.reshape(B, S, D)


def ref_encoder_layer(x, mask, p, heads):
    """Pure-JAX f32 reference mirroring the PyTorch forward (eval mode)."""
    B, S, D = x.shape
    dk = D // heads

    def norm(v, a, b):
        mean = v.mean(-1, keepdims=True)
        var = ((v - mean) ** 2).sum(-1, keepdims=True) / (D - 1)
        return a * (v - mean) / (jnp.sqrt(var) + EPS) + b

    x2 = norm(x, p["n1a"], p["n1b"])
    q = x2 @ p["wq"] + p["bq"]
    k = x2 @ p["wk"] + p["bk"]
    v = x2 @ p["wv"] + p["bv"]
    qh = q.reshape(B, S, heads, dk).transpose(0, 2, 1, 3)
    kh = k.reshape(B, S, heads, dk).transpose(0, 2, 1, 3)
    vh = v.reshape(B, S, heads, dk).transpose(0, 2, 1, 3)
    s = jnp.einsum("bhqd,bhkd->bhqk", qh, kh) / math.sqrt(dk)
    s = jnp.where(mask[:, None, :, :] == 0, -1e9, s)
    pattn = jax.nn.softmax(s, axis=-1)
    o = jnp.einsum("bhqk,bhkd->bhqd", pattn, vh)
    concat = o.transpose(0, 2, 1, 3).reshape(B, S, D)
    x = x + (concat @ p["wo"] + p["bo"])
    x2 = norm(x, p["n2a"], p["n2b"])
    ff = jnp.maximum(x2 @ p["w1"] + p["b1"], 0.0) @ p["w2"] + p["b2"]
    return x + ff


if __name__ == "__main__":
    B, S, D, H, D_FF = 2, 8, 32, 4, 2048  # d_ff = FeedForward default

    key = jax.random.PRNGKey(0)
    ks = jax.random.split(key, 12)

    params = {
        "n1a": jnp.ones((1, D), jnp.float32),
        "n1b": jnp.zeros((1, D), jnp.float32),
        "wq": 0.1 * jax.random.normal(ks[0], (D, D), jnp.float32),
        "bq": 0.1 * jax.random.normal(ks[1], (1, D), jnp.float32),
        "wk": 0.1 * jax.random.normal(ks[2], (D, D), jnp.float32),
        "bk": 0.1 * jax.random.normal(ks[3], (1, D), jnp.float32),
        "wv": 0.1 * jax.random.normal(ks[4], (D, D), jnp.float32),
        "bv": 0.1 * jax.random.normal(ks[5], (1, D), jnp.float32),
        "wo": 0.1 * jax.random.normal(ks[6], (D, D), jnp.float32),
        "bo": 0.1 * jax.random.normal(ks[7], (1, D), jnp.float32),
        "n2a": jnp.ones((1, D), jnp.float32),
        "n2b": jnp.zeros((1, D), jnp.float32),
        "w1": 0.05 * jax.random.normal(ks[8], (D, D_FF), jnp.float32),
        "b1": 0.05 * jax.random.normal(ks[9], (1, D_FF), jnp.float32),
        "w2": 0.05 * jax.random.normal(ks[10], (D_FF, D), jnp.float32),
        "b2": 0.05 * jax.random.normal(ks[11], (1, D), jnp.float32),
    }

    x = jax.random.normal(jax.random.PRNGKey(42), (B, S, D), jnp.float32)
    # mask: 1 = attend, 0 = masked (mask out the last two keys of batch 1)
    mask = np.ones((B, 1, S), dtype=np.int32)
    mask[1, 0, -2:] = 0
    mask = jnp.asarray(mask)

    out = encoder_layer(x, mask, params, H)
    out = jax.block_until_ready(out)

    ref = ref_encoder_layer(x, mask, params, H)
    # bf16 matmul operands (f32 accumulation) + EUP approx softmax reciprocal
    np.testing.assert_allclose(np.asarray(out), np.asarray(ref), rtol=2e-2, atol=2e-2)

    print("KERNEL_OK")
</pallas_src>

<mosaic_0001>
module attributes {stable_mosaic.version = 11 : i64} {
  func.func @encoder_layer_kernel(%arg0: i32, %arg1: memref<16x32xf32, #tpu.memory_space<vmem>>, %arg2: memref<2x1x8xi32, #tpu.memory_space<vmem>>, %arg3: memref<1x32xf32, #tpu.memory_space<vmem>>, %arg4: memref<1x32xf32, #tpu.memory_space<vmem>>, %arg5: memref<32x96xbf16, #tpu.memory_space<vmem>>, %arg6: memref<1x96xf32, #tpu.memory_space<vmem>>, %arg7: memref<32x32xbf16, #tpu.memory_space<vmem>>, %arg8: memref<1x32xf32, #tpu.memory_space<vmem>>, %arg9: memref<1x32xf32, #tpu.memory_space<vmem>>, %arg10: memref<1x32xf32, #tpu.memory_space<vmem>>, %arg11: memref<32x1024xbf16, #tpu.memory_space<vmem>>, %arg12: memref<1x1024xf32, #tpu.memory_space<vmem>>, %arg13: memref<1024x32xbf16, #tpu.memory_space<vmem>>, %arg14: memref<1x32xf32, #tpu.memory_space<vmem>>, %arg15: memref<16x32xf32, #tpu.memory_space<vmem>>, %arg16: memref<16x32xbf16, #tpu.memory_space<vmem>>, %arg17: memref<16x32xf32, #tpu.memory_space<vmem>>) attributes {dimension_semantics = [#tpu.dimension_semantics<arbitrary>], iteration_bounds = array<i64: 2>, scalar_prefetch = 0 : i64, scratch_operands = 2 : i64, tpu.core_type = #tpu.core_type<tc>, window_params = [{pipeline_mode = #tpu.pipeline_mode<synchronous>, transform_indices = @transform_0, window_bounds = array<i64: 16, 32>}, {pipeline_mode = #tpu.pipeline_mode<synchronous>, transform_indices = @transform_1, window_bounds = array<i64: 2, 1, 8>}, {pipeline_mode = #tpu.pipeline_mode<synchronous>, transform_indices = @transform_2, window_bounds = array<i64: 1, 32>}, {pipeline_mode = #tpu.pipeline_mode<synchronous>, transform_indices = @transform_3, window_bounds = array<i64: 1, 32>}, {pipeline_mode = #tpu.pipeline_mode<synchronous>, transform_indices = @transform_4, window_bounds = array<i64: 32, 96>}, {pipeline_mode = #tpu.pipeline_mode<synchronous>, transform_indices = @transform_5, window_bounds = array<i64: 1, 96>}, {pipeline_mode = #tpu.pipeline_mode<synchronous>, transform_indices = @transform_6, window_bounds = array<i64: 32, 32>}, {pipeline_mode = #tpu.pipeline_mode<synchronous>, transform_indices = @transform_7, window_bounds = array<i64: 1, 32>}, {pipeline_mode = #tpu.pipeline_mode<synchronous>, transform_indices = @transform_8, window_bounds = array<i64: 1, 32>}, {pipeline_mode = #tpu.pipeline_mode<synchronous>, transform_indices = @transform_9, window_bounds = array<i64: 1, 32>}, {transform_indices = @transform_10, window_bounds = array<i64: 32, 1024>}, {transform_indices = @transform_11, window_bounds = array<i64: 1, 1024>}, {transform_indices = @transform_12, window_bounds = array<i64: 1024, 32>}, {pipeline_mode = #tpu.pipeline_mode<synchronous>, transform_indices = @transform_13, window_bounds = array<i64: 1, 32>}, {pipeline_mode = #tpu.pipeline_mode<synchronous>, transform_indices = @transform_14, window_bounds = array<i64: 16, 32>}]} {
    %c0_i32 = arith.constant 0 : i32
    %0 = arith.cmpi eq, %arg0, %c0_i32 : i32
    %1 = arith.extui %0 : i1 to i32
    %c0_i32_0 = arith.constant 0 : i32
    %2 = arith.cmpi ne, %1, %c0_i32_0 : i32
    scf.if %2 {
      %c0_15 = arith.constant 0 : index
      %c0_16 = arith.constant 0 : index
      %20 = vector.load %arg1[%c0_15, %c0_16] : memref<16x32xf32, #tpu.memory_space<vmem>>, vector<16x32xf32>
      %c0_17 = arith.constant 0 : index
      %c0_18 = arith.constant 0 : index
      %21 = vector.load %arg3[%c0_17, %c0_18] : memref<1x32xf32, #tpu.memory_space<vmem>>, vector<1x32xf32>
      %c0_19 = arith.constant 0 : index
      %c0_20 = arith.constant 0 : index
      %22 = vector.load %arg4[%c0_19, %c0_20] : memref<1x32xf32, #tpu.memory_space<vmem>>, vector<1x32xf32>
      %cst_21 = arith.constant dense<0.000000e+00> : vector<16xf32>
      %23 = vector.multi_reduction <add>, %20, %cst_21 [1] : vector<16x32xf32> to vector<16xf32>
      %24 = vector.shape_cast %23 : vector<16xf32> to vector<16x1xf32>
      %cst_22 = arith.constant 3.200000e+01 : f32
      %25 = vector.broadcast %cst_22 : f32 to vector<16x1xf32>
      %26 = arith.divf %24, %25 : vector<16x1xf32>
      %27 = vector.broadcast %26 : vector<16x1xf32> to vector<16x32xf32>
      %28 = arith.subf %20, %27 : vector<16x32xf32>
      %29 = arith.mulf %28, %28 : vector<16x32xf32>
      %cst_23 = arith.constant dense<0.000000e+00> : vector<16xf32>
      %30 = vector.multi_reduction <add>, %29, %cst_23 [1] : vector<16x32xf32> to vector<16xf32>
      %31 = vector.shape_cast %30 : vector<16xf32> to vector<16x1xf32>
      %cst_24 = arith.constant 3.100000e+01 : f32
      %32 = vector.broadcast %cst_24 : f32 to vector<16x1xf32>
      %33 = arith.divf %31, %32 : vector<16x1xf32>
      %34 = vector.broadcast %26 : vector<16x1xf32> to vector<16x32xf32>
      %35 = arith.subf %20, %34 : vector<16x32xf32>
      %36 = vector.broadcast %21 : vector<1x32xf32> to vector<16x32xf32>
      %37 = arith.mulf %36, %35 : vector<16x32xf32>
      %38 = math.sqrt %33 : vector<16x1xf32>
      %cst_25 = arith.constant 9.99999997E-7 : f32
      %39 = vector.broadcast %cst_25 : f32 to vector<16x1xf32>
      %40 = arith.addf %38, %39 : vector<16x1xf32>
      %41 = vector.broadcast %40 : vector<16x1xf32> to vector<16x32xf32>
      %42 = arith.divf %37, %41 : vector<16x32xf32>
      %43 = vector.broadcast %22 : vector<1x32xf32> to vector<16x32xf32>
      %44 = arith.addf %42, %43 : vector<16x32xf32>
      %45 = arith.truncf %44 : vector<16x32xf32> to vector<16x32xbf16>
      %c0_26 = arith.constant 0 : index
      %c0_27 = arith.constant 0 : index
      %46 = vector.load %arg5[%c0_26, %c0_27] : memref<32x96xbf16, #tpu.memory_space<vmem>>, vector<32x96xbf16>
      %cst_28 = arith.constant dense<0.000000e+00> : vector<16x96xf32>
      %47 = tpu.matmul %45, %46, %cst_28 {dimension_numbers = #tpu.dot_dimension_numbers<[1], [0], [0], [1], [0, 0, 1, 1], [], []>} : vector<16x32xbf16>, vector<32x96xbf16>, vector<16x96xf32> -> vector<16x96xf32>
      %c0_29 = arith.constant 0 : index
      %c0_30 = arith.constant 0 : index
      %48 = vector.load %arg6[%c0_29, %c0_30] : memref<1x96xf32, #tpu.memory_space<vmem>>, vector<1x96xf32>
      %49 = vector.broadcast %48 : vector<1x96xf32> to vector<16x96xf32>
      %50 = arith.addf %47, %49 : vector<16x96xf32>
      %51 = vector.extract_strided_slice %50 {offsets = [0, 0], sizes = [16, 32], strides = [1, 1]} : vector<16x96xf32> to vector<16x32xf32>
      %cst_31 = arith.constant 0.353553385 : f32
      %52 = vector.broadcast %cst_31 : f32 to vector<16x32xf32>
      %53 = arith.mulf %51, %52 : vector<16x32xf32>
      %54 = arith.truncf %53 : vector<16x32xf32> to vector<16x32xbf16>
      %55 = vector.extract_strided_slice %50 {offsets = [0, 32], sizes = [16, 32], strides = [1, 1]} : vector<16x96xf32> to vector<16x32xf32>
      %56 = arith.truncf %55 : vector<16x32xf32> to vector<16x32xbf16>
      %57 = vector.extract_strided_slice %50 {offsets = [0, 64], sizes = [16, 32], strides = [1, 1]} : vector<16x96xf32> to vector<16x32xf32>
      %58 = arith.truncf %57 : vector<16x32xf32> to vector<16x32xbf16>
      %c0_32 = arith.constant 0 : index
      %c0_33 = arith.constant 0 : index
      %c0_34 = arith.constant 0 : index
      %59 = vector.load %arg2[%c0_32, %c0_33, %c0_34] : memref<2x1x8xi32, #tpu.memory_space<vmem>>, vector<1x1x8xi32>
      %60 = vector.shape_cast %59 : vector<1x1x8xi32> to vector<1x8xi32>
      %c0_i32_35 = arith.constant 0 : i32
      %61 = vector.broadcast %c0_i32_35 : i32 to vector<1x8xi32>
      %62 = arith.cmpi eq, %60, %61 : vector<1x8xi32>
      %63 = vector.shape_cast %62 : vector<1x8xi1> to vector<1x8xi1>
      %64 = vector.broadcast %63 : vector<1x8xi1> to vector<8x8xi1>
      %65 = vector.extract_strided_slice %54 {offsets = [0, 0], sizes = [8, 8], strides = [1, 1]} : vector<16x32xbf16> to vector<8x8xbf16>
      %66 = vector.extract_strided_slice %56 {offsets = [0, 0], sizes = [8, 8], strides = [1, 1]} : vector<16x32xbf16> to vector<8x8xbf16>
      %67 = vector.extract_strided_slice %58 {offsets = [0, 0], sizes = [8, 8], strides = [1, 1]} : vector<16x32xbf16> to vector<8x8xbf16>
      %cst_36 = arith.constant dense<0.000000e+00> : vector<8x8xf32>
      %68 = tpu.matmul %65, %66, %cst_36 {dimension_numbers = #tpu.dot_dimension_numbers<[1], [1], [0], [0], [0, 0, 1, 0], [], []>} : vector<8x8xbf16>, vector<8x8xbf16>, vector<8x8xf32> -> vector<8x8xf32>
      %cst_37 = arith.constant -1.000000e+09 : f32
      %69 = vector.broadcast %cst_37 : f32 to vector<8x8xf32>
      %70 = arith.select %64, %69, %68 : vector<8x8xi1>, vector<8x8xf32>
      %cst_38 = arith.constant dense<0xFF800000> : vector<8xf32>
      %71 = vector.multi_reduction <maximumf>, %70, %cst_38 [1] : vector<8x8xf32> to vector<8xf32>
      %72 = vector.shape_cast %71 : vector<8xf32> to vector<8x1xf32>
      %73 = vector.broadcast %72 : vector<8x1xf32> to vector<8x8xf32>
      %74 = arith.subf %70, %73 : vector<8x8xf32>
      %75 = math.exp %74 : vector<8x8xf32>
      %cst_39 = arith.constant dense<0.000000e+00> : vector<8xf32>
      %76 = vector.multi_reduction <add>, %75, %cst_39 [1] : vector<8x8xf32> to vector<8xf32>
      %77 = vector.shape_cast %76 : vector<8xf32> to vector<8x1xf32>
      %78 = tpu.reciprocal %77 {approx = true} : vector<8x1xf32> -> vector<8x1xf32>
      %79 = vector.broadcast %78 : vector<8x1xf32> to vector<8x8xf32>
      %80 = arith.mulf %75, %79 : vector<8x8xf32>
      %81 = arith.truncf %80 : vector<8x8xf32> to vector<8x8xbf16>
      %cst_40 = arith.constant dense<0.000000e+00> : vector<8x8xf32>
      %82 = tpu.matmul %81, %67, %cst_40 {dimension_numbers = #tpu.dot_dimension_numbers<[1], [0], [0], [1], [0, 0, 1, 1], [], []>} : vector<8x8xbf16>, vector<8x8xbf16>, vector<8x8xf32> -> vector<8x8xf32>
      %83 = vector.extract_strided_slice %54 {offsets = [0, 8], sizes = [8, 8], strides = [1, 1]} : vector<16x32xbf16> to vector<8x8xbf16>
      %84 = vector.extract_strided_slice %56 {offsets = [0, 8], sizes = [8, 8], strides = [1, 1]} : vector<16x32xbf16> to vector<8x8xbf16>
      %85 = vector.extract_strided_slice %58 {offsets = [0, 8], sizes = [8, 8], strides = [1, 1]} : vector<16x32xbf16> to vector<8x8xbf16>
      %cst_41 = arith.constant dense<0.000000e+00> : vector<8x8xf32>
      %86 = tpu.matmul %83, %84, %cst_41 {dimension_numbers = #tpu.dot_dimension_numbers<[1], [1], [0], [0], [0, 0, 1, 0], [], []>} : vector<8x8xbf16>, vector<8x8xbf16>, vector<8x8xf32> -> vector<8x8xf32>
      %cst_42 = arith.constant -1.000000e+09 : f32
      %87 = vector.broadcast %cst_42 : f32 to vector<8x8xf32>
      %88 = arith.select %64, %87, %86 : vector<8x8xi1>, vector<8x8xf32>
      %cst_43 = arith.constant dense<0xFF800000> : vector<8xf32>
      %89 = vector.multi_reduction <maximumf>, %88, %cst_43 [1] : vector<8x8xf32> to vector<8xf32>
      %90 = vector.shape_cast %89 : vector<8xf32> to vector<8x1xf32>
      %91 = vector.broadcast %90 : vector<8x1xf32> to vector<8x8xf32>
      %92 = arith.subf %88, %91 : vector<8x8xf32>
      %93 = math.exp %92 : vector<8x8xf32>
      %cst_44 = arith.constant dense<0.000000e+00> : vector<8xf32>
      %94 = vector.multi_reduction <add>, %93, %cst_44 [1] : vector<8x8xf32> to vector<8xf32>
      %95 = vector.shape_cast %94 : vector<8xf32> to vector<8x1xf32>
      %96 = tpu.reciprocal %95 {approx = true} : vector<8x1xf32> -> vector<8x1xf32>
      %97 = vector.broadcast %96 : vector<8x1xf32> to vector<8x8xf32>
      %98 = arith.mulf %93, %97 : vector<8x8xf32>
      %99 = arith.truncf %98 : vector<8x8xf32> to vector<8x8xbf16>
      %cst_45 = arith.constant dense<0.000000e+00> : vector<8x8xf32>
      %100 = tpu.matmul %99, %85, %cst_45 {dimension_numbers = #tpu.dot_dimension_numbers<[1], [0], [0], [1], [0, 0, 1, 1], [], []>} : vector<8x8xbf16>, vector<8x8xbf16>, vector<8x8xf32> -> vector<8x8xf32>
      %101 = vector.extract_strided_slice %54 {offsets = [0, 16], sizes = [8, 8], strides = [1, 1]} : vector<16x32xbf16> to vector<8x8xbf16>
      %102 = vector.extract_strided_slice %56 {offsets = [0, 16], sizes = [8, 8], strides = [1, 1]} : vector<16x32xbf16> to vector<8x8xbf16>
      %103 = vector.extract_strided_slice %58 {offsets = [0, 16], sizes = [8, 8], strides = [1, 1]} : vector<16x32xbf16> to vector<8x8xbf16>
      %cst_46 = arith.constant dense<0.000000e+00> : vector<8x8xf32>
      %104 = tpu.matmul %101, %102, %cst_46 {dimension_numbers = #tpu.dot_dimension_numbers<[1], [1], [0], [0], [0, 0, 1, 0], [], []>} : vector<8x8xbf16>, vector<8x8xbf16>, vector<8x8xf32> -> vector<8x8xf32>
      %cst_47 = arith.constant -1.000000e+09 : f32
      %105 = vector.broadcast %cst_47 : f32 to vector<8x8xf32>
      %106 = arith.select %64, %105, %104 : vector<8x8xi1>, vector<8x8xf32>
      %cst_48 = arith.constant dense<0xFF800000> : vector<8xf32>
      %107 = vector.multi_reduction <maximumf>, %106, %cst_48 [1] : vector<8x8xf32> to vector<8xf32>
      %108 = vector.shape_cast %107 : vector<8xf32> to vector<8x1xf32>
      %109 = vector.broadcast %108 : vector<8x1xf32> to vector<8x8xf32>
      %110 = arith.subf %106, %109 : vector<8x8xf32>
      %111 = math.exp %110 : vector<8x8xf32>
      %cst_49 = arith.constant dense<0.000000e+00> : vector<8xf32>
      %112 = vector.multi_reduction <add>, %111, %cst_49 [1] : vector<8x8xf32> to vector<8xf32>
      %113 = vector.shape_cast %112 : vector<8xf32> to vector<8x1xf32>
      %114 = tpu.reciprocal %113 {approx = true} : vector<8x1xf32> -> vector<8x1xf32>
      %115 = vector.broadcast %114 : vector<8x1xf32> to vector<8x8xf32>
      %116 = arith.mulf %111, %115 : vector<8x8xf32>
      %117 = arith.truncf %116 : vector<8x8xf32> to vector<8x8xbf16>
      %cst_50 = arith.constant dense<0.000000e+00> : vector<8x8xf32>
      %118 = tpu.matmul %117, %103, %cst_50 {dimension_numbers = #tpu.dot_dimension_numbers<[1], [0], [0], [1], [0, 0, 1, 1], [], []>} : vector<8x8xbf16>, vector<8x8xbf16>, vector<8x8xf32> -> vector<8x8xf32>
      %119 = vector.extract_strided_slice %54 {offsets = [0, 24], sizes = [8, 8], strides = [1, 1]} : vector<16x32xbf16> to vector<8x8xbf16>
      %120 = vector.extract_strided_slice %56 {offsets = [0, 24], sizes = [8, 8], strides = [1, 1]} : vector<16x32xbf16> to vector<8x8xbf16>
      %121 = vector.extract_strided_slice %58 {offsets = [0, 24], sizes = [8, 8], strides = [1, 1]} : vector<16x32xbf16> to vector<8x8xbf16>
      %cst_51 = arith.constant dense<0.000000e+00> : vector<8x8xf32>
      %122 = tpu.matmul %119, %120, %cst_51 {dimension_numbers = #tpu.dot_dimension_numbers<[1], [1], [0], [0], [0, 0, 1, 0], [], []>} : vector<8x8xbf16>, vector<8x8xbf16>, vector<8x8xf32> -> vector<8x8xf32>
      %cst_52 = arith.constant -1.000000e+09 : f32
      %123 = vector.broadcast %cst_52 : f32 to vector<8x8xf32>
      %124 = arith.select %64, %123, %122 : vector<8x8xi1>, vector<8x8xf32>
      %cst_53 = arith.constant dense<0xFF800000> : vector<8xf32>
      %125 = vector.multi_reduction <maximumf>, %124, %cst_53 [1] : vector<8x8xf32> to vector<8xf32>
      %126 = vector.shape_cast %125 : vector<8xf32> to vector<8x1xf32>
      %127 = vector.broadcast %126 : vector<8x1xf32> to vector<8x8xf32>
      %128 = arith.subf %124, %127 : vector<8x8xf32>
      %129 = math.exp %128 : vector<8x8xf32>
      %cst_54 = arith.constant dense<0.000000e+00> : vector<8xf32>
      %130 = vector.multi_reduction <add>, %129, %cst_54 [1] : vector<8x8xf32> to vector<8xf32>
      %131 = vector.shape_cast %130 : vector<8xf32> to vector<8x1xf32>
      %132 = tpu.reciprocal %131 {approx = true} : vector<8x1xf32> -> vector<8x1xf32>
      %133 = vector.broadcast %132 : vector<8x1xf32> to vector<8x8xf32>
      %134 = arith.mulf %129, %133 : vector<8x8xf32>
      %135 = arith.truncf %134 : vector<8x8xf32> to vector<8x8xbf16>
      %cst_55 = arith.constant dense<0.000000e+00> : vector<8x8xf32>
      %136 = tpu.matmul %135, %121, %cst_55 {dimension_numbers = #tpu.dot_dimension_numbers<[1], [0], [0], [1], [0, 0, 1, 1], [], []>} : vector<8x8xbf16>, vector<8x8xbf16>, vector<8x8xf32> -> vector<8x8xf32>
      %137 = tpu.concatenate %82, %100, %118, %136 in 1 : vector<8x8xf32>, vector<8x8xf32>, vector<8x8xf32>, vector<8x8xf32> -> vector<8x32xf32>
      %c1 = arith.constant 1 : index
      %c0_56 = arith.constant 0 : index
      %c0_57 = arith.constant 0 : index
      %138 = vector.load %arg2[%c1, %c0_56, %c0_57] : memref<2x1x8xi32, #tpu.memory_space<vmem>>, vector<1x1x8xi32>
      %139 = vector.shape_cast %138 : vector<1x1x8xi32> to vector<1x8xi32>
      %c0_i32_58 = arith.constant 0 : i32
      %140 = vector.broadcast %c0_i32_58 : i32 to vector<1x8xi32>
      %141 = arith.cmpi eq, %139, %140 : vector<1x8xi32>
      %142 = vector.shape_cast %141 : vector<1x8xi1> to vector<1x8xi1>
      %143 = vector.broadcast %142 : vector<1x8xi1> to vector<8x8xi1>
      %144 = vector.extract_strided_slice %54 {offsets = [8, 0], sizes = [8, 8], strides = [1, 1]} : vector<16x32xbf16> to vector<8x8xbf16>
      %145 = vector.extract_strided_slice %56 {offsets = [8, 0], sizes = [8, 8], strides = [1, 1]} : vector<16x32xbf16> to vector<8x8xbf16>
      %146 = vector.extract_strided_slice %58 {offsets = [8, 0], sizes = [8, 8], strides = [1, 1]} : vector<16x32xbf16> to vector<8x8xbf16>
      %cst_59 = arith.constant dense<0.000000e+00> : vector<8x8xf32>
      %147 = tpu.matmul %144, %145, %cst_59 {dimension_numbers = #tpu.dot_dimension_numbers<[1], [1], [0], [0], [0, 0, 1, 0], [], []>} : vector<8x8xbf16>, vector<8x8xbf16>, vector<8x8xf32> -> vector<8x8xf32>
      %cst_60 = arith.constant -1.000000e+09 : f32
      %148 = vector.broadcast %cst_60 : f32 to vector<8x8xf32>
      %149 = arith.select %143, %148, %147 : vector<8x8xi1>, vector<8x8xf32>
      %cst_61 = arith.constant dense<0xFF800000> : vector<8xf32>
      %150 = vector.multi_reduction <maximumf>, %149, %cst_61 [1] : vector<8x8xf32> to vector<8xf32>
      %151 = vector.shape_cast %150 : vector<8xf32> to vector<8x1xf32>
      %152 = vector.broadcast %151 : vector<8x1xf32> to vector<8x8xf32>
      %153 = arith.subf %149, %152 : vector<8x8xf32>
      %154 = math.exp %153 : vector<8x8xf32>
      %cst_62 = arith.constant dense<0.000000e+00> : vector<8xf32>
      %155 = vector.multi_reduction <add>, %154, %cst_62 [1] : vector<8x8xf32> to vector<8xf32>
      %156 = vector.shape_cast %155 : vector<8xf32> to vector<8x1xf32>
      %157 = tpu.reciprocal %156 {approx = true} : vector<8x1xf32> -> vector<8x1xf32>
      %158 = vector.broadcast %157 : vector<8x1xf32> to vector<8x8xf32>
      %159 = arith.mulf %154, %158 : vector<8x8xf32>
      %160 = arith.truncf %159 : vector<8x8xf32> to vector<8x8xbf16>
      %cst_63 = arith.constant dense<0.000000e+00> : vector<8x8xf32>
      %161 = tpu.matmul %160, %146, %cst_63 {dimension_numbers = #tpu.dot_dimension_numbers<[1], [0], [0], [1], [0, 0, 1, 1], [], []>} : vector<8x8xbf16>, vector<8x8xbf16>, vector<8x8xf32> -> vector<8x8xf32>
      %162 = vector.extract_strided_slice %54 {offsets = [8, 8], sizes = [8, 8], strides = [1, 1]} : vector<16x32xbf16> to vector<8x8xbf16>
      %163 = vector.extract_strided_slice %56 {offsets = [8, 8], sizes = [8, 8], strides = [1, 1]} : vector<16x32xbf16> to vector<8x8xbf16>
      %164 = vector.extract_strided_slice %58 {offsets = [8, 8], sizes = [8, 8], strides = [1, 1]} : vector<16x32xbf16> to vector<8x8xbf16>
      %cst_64 = arith.constant dense<0.000000e+00> : vector<8x8xf32>
      %165 = tpu.matmul %162, %163, %cst_64 {dimension_numbers = #tpu.dot_dimension_numbers<[1], [1], [0], [0], [0, 0, 1, 0], [], []>} : vector<8x8xbf16>, vector<8x8xbf16>, vector<8x8xf32> -> vector<8x8xf32>
      %cst_65 = arith.constant -1.000000e+09 : f32
      %166 = vector.broadcast %cst_65 : f32 to vector<8x8xf32>
      %167 = arith.select %143, %166, %165 : vector<8x8xi1>, vector<8x8xf32>
      %cst_66 = arith.constant dense<0xFF800000> : vector<8xf32>
      %168 = vector.multi_reduction <maximumf>, %167, %cst_66 [1] : vector<8x8xf32> to vector<8xf32>
      %169 = vector.shape_cast %168 : vector<8xf32> to vector<8x1xf32>
      %170 = vector.broadcast %169 : vector<8x1xf32> to vector<8x8xf32>
      %171 = arith.subf %167, %170 : vector<8x8xf32>
      %172 = math.exp %171 : vector<8x8xf32>
      %cst_67 = arith.constant dense<0.000000e+00> : vector<8xf32>
      %173 = vector.multi_reduction <add>, %172, %cst_67 [1] : vector<8x8xf32> to vector<8xf32>
      %174 = vector.shape_cast %173 : vector<8xf32> to vector<8x1xf32>
      %175 = tpu.reciprocal %174 {approx = true} : vector<8x1xf32> -> vector<8x1xf32>
      %176 = vector.broadcast %175 : vector<8x1xf32> to vector<8x8xf32>
      %177 = arith.mulf %172, %176 : vector<8x8xf32>
      %178 = arith.truncf %177 : vector<8x8xf32> to vector<8x8xbf16>
      %cst_68 = arith.constant dense<0.000000e+00> : vector<8x8xf32>
      %179 = tpu.matmul %178, %164, %cst_68 {dimension_numbers = #tpu.dot_dimension_numbers<[1], [0], [0], [1], [0, 0, 1, 1], [], []>} : vector<8x8xbf16>, vector<8x8xbf16>, vector<8x8xf32> -> vector<8x8xf32>
      %180 = vector.extract_strided_slice %54 {offsets = [8, 16], sizes = [8, 8], strides = [1, 1]} : vector<16x32xbf16> to vector<8x8xbf16>
      %181 = vector.extract_strided_slice %56 {offsets = [8, 16], sizes = [8, 8], strides = [1, 1]} : vector<16x32xbf16> to vector<8x8xbf16>
      %182 = vector.extract_strided_slice %58 {offsets = [8, 16], sizes = [8, 8], strides = [1, 1]} : vector<16x32xbf16> to vector<8x8xbf16>
      %cst_69 = arith.constant dense<0.000000e+00> : vector<8x8xf32>
      %183 = tpu.matmul %180, %181, %cst_69 {dimension_numbers = #tpu.dot_dimension_numbers<[1], [1], [0], [0], [0, 0, 1, 0], [], []>} : vector<8x8xbf16>, vector<8x8xbf16>, vector<8x8xf32> -> vector<8x8xf32>
      %cst_70 = arith.constant -1.000000e+09 : f32
      %184 = vector.broadcast %cst_70 : f32 to vector<8x8xf32>
      %185 = arith.select %143, %184, %183 : vector<8x8xi1>, vector<8x8xf32>
      %cst_71 = arith.constant dense<0xFF800000> : vector<8xf32>
      %186 = vector.multi_reduction <maximumf>, %185, %cst_71 [1] : vector<8x8xf32> to vector<8xf32>
      %187 = vector.shape_cast %186 : vector<8xf32> to vector<8x1xf32>
      %188 = vector.broadcast %187 : vector<8x1xf32> to vector<8x8xf32>
      %189 = arith.subf %185, %188 : vector<8x8xf32>
      %190 = math.exp %189 : vector<8x8xf32>
      %cst_72 = arith.constant dense<0.000000e+00> : vector<8xf32>
      %191 = vector.multi_reduction <add>, %190, %cst_72 [1] : vector<8x8xf32> to vector<8xf32>
      %192 = vector.shape_cast %191 : vector<8xf32> to vector<8x1xf32>
      %193 = tpu.reciprocal %192 {approx = true} : vector<8x1xf32> -> vector<8x1xf32>
      %194 = vector.broadcast %193 : vector<8x1xf32> to vector<8x8xf32>
      %195 = arith.mulf %190, %194 : vector<8x8xf32>
      %196 = arith.truncf %195 : vector<8x8xf32> to vector<8x8xbf16>
      %cst_73 = arith.constant dense<0.000000e+00> : vector<8x8xf32>
      %197 = tpu.matmul %196, %182, %cst_73 {dimension_numbers = #tpu.dot_dimension_numbers<[1], [0], [0], [1], [0, 0, 1, 1], [], []>} : vector<8x8xbf16>, vector<8x8xbf16>, vector<8x8xf32> -> vector<8x8xf32>
      %198 = vector.extract_strided_slice %54 {offsets = [8, 24], sizes = [8, 8], strides = [1, 1]} : vector<16x32xbf16> to vector<8x8xbf16>
      %199 = vector.extract_strided_slice %56 {offsets = [8, 24], sizes = [8, 8], strides = [1, 1]} : vector<16x32xbf16> to vector<8x8xbf16>
      %200 = vector.extract_strided_slice %58 {offsets = [8, 24], sizes = [8, 8], strides = [1, 1]} : vector<16x32xbf16> to vector<8x8xbf16>
      %cst_74 = arith.constant dense<0.000000e+00> : vector<8x8xf32>
      %201 = tpu.matmul %198, %199, %cst_74 {dimension_numbers = #tpu.dot_dimension_numbers<[1], [1], [0], [0], [0, 0, 1, 0], [], []>} : vector<8x8xbf16>, vector<8x8xbf16>, vector<8x8xf32> -> vector<8x8xf32>
      %cst_75 = arith.constant -1.000000e+09 : f32
      %202 = vector.broadcast %cst_75 : f32 to vector<8x8xf32>
      %203 = arith.select %143, %202, %201 : vector<8x8xi1>, vector<8x8xf32>
      %cst_76 = arith.constant dense<0xFF800000> : vector<8xf32>
      %204 = vector.multi_reduction <maximumf>, %203, %cst_76 [1] : vector<8x8xf32> to vector<8xf32>
      %205 = vector.shape_cast %204 : vector<8xf32> to vector<8x1xf32>
      %206 = vector.broadcast %205 : vector<8x1xf32> to vector<8x8xf32>
      %207 = arith.subf %203, %206 : vector<8x8xf32>
      %208 = math.exp %207 : vector<8x8xf32>
      %cst_77 = arith.constant dense<0.000000e+00> : vector<8xf32>
      %209 = vector.multi_reduction <add>, %208, %cst_77 [1] : vector<8x8xf32> to vector<8xf32>
      %210 = vector.shape_cast %209 : vector<8xf32> to vector<8x1xf32>
      %211 = tpu.reciprocal %210 {approx = true} : vector<8x1xf32> -> vector<8x1xf32>
      %212 = vector.broadcast %211 : vector<8x1xf32> to vector<8x8xf32>
      %213 = arith.mulf %208, %212 : vector<8x8xf32>
      %214 = arith.truncf %213 : vector<8x8xf32> to vector<8x8xbf16>
      %cst_78 = arith.constant dense<0.000000e+00> : vector<8x8xf32>
      %215 = tpu.matmul %214, %200, %cst_78 {dimension_numbers = #tpu.dot_dimension_numbers<[1], [0], [0], [1], [0, 0, 1, 1], [], []>} : vector<8x8xbf16>, vector<8x8xbf16>, vector<8x8xf32> -> vector<8x8xf32>
      %216 = tpu.concatenate %161, %179, %197, %215 in 1 : vector<8x8xf32>, vector<8x8xf32>, vector<8x8xf32>, vector<8x8xf32> -> vector<8x32xf32>
      %217 = tpu.concatenate %137, %216 in 0 : vector<8x32xf32>, vector<8x32xf32> -> vector<16x32xf32>
      %218 = arith.truncf %217 : vector<16x32xf32> to vector<16x32xbf16>
      %c0_79 = arith.constant 0 : index
      %c0_80 = arith.constant 0 : index
      %219 = vector.load %arg7[%c0_79, %c0_80] : memref<32x32xbf16, #tpu.memory_space<vmem>>, vector<32x32xbf16>
      %cst_81 = arith.constant dense<0.000000e+00> : vector<16x32xf32>
      %220 = tpu.matmul %218, %219, %cst_81 {dimension_numbers = #tpu.dot_dimension_numbers<[1], [0], [0], [1], [0, 0, 1, 1], [], []>} : vector<16x32xbf16>, vector<32x32xbf16>, vector<16x32xf32> -> vector<16x32xf32>
      %c0_82 = arith.constant 0 : index
      %c0_83 = arith.constant 0 : index
      %221 = vector.load %arg8[%c0_82, %c0_83] : memref<1x32xf32, #tpu.memory_space<vmem>>, vector<1x32xf32>
      %222 = vector.broadcast %221 : vector<1x32xf32> to vector<16x32xf32>
      %223 = arith.addf %220, %222 : vector<16x32xf32>
      %224 = arith.addf %20, %223 : vector<16x32xf32>
      %c0_84 = arith.constant 0 : index
      %c0_85 = arith.constant 0 : index
      %225 = vector.load %arg14[%c0_84, %c0_85] : memref<1x32xf32, #tpu.memory_space<vmem>>, vector<1x32xf32>
      %226 = vector.broadcast %225 : vector<1x32xf32> to vector<16x32xf32>
      %227 = arith.addf %224, %226 : vector<16x32xf32>
      %c0_86 = arith.constant 0 : index
      %c0_87 = arith.constant 0 : index
      %228 = vector.load %arg17[%c0_86, %c0_87] : memref<16x32xf32, #tpu.memory_space<vmem>>, vector<16x32xf32>
      tpu.vector_store %arg17[%c0_86, %c0_87], %227 {strides = array<i32>} : memref<16x32xf32, #tpu.memory_space<vmem>>, vector<16x32xf32>,
      %c0_88 = arith.constant 0 : index
      %c0_89 = arith.constant 0 : index
      %229 = vector.load %arg9[%c0_88, %c0_89] : memref<1x32xf32, #tpu.memory_space<vmem>>, vector<1x32xf32>
      %c0_90 = arith.constant 0 : index
      %c0_91 = arith.constant 0 : index
      %230 = vector.load %arg10[%c0_90, %c0_91] : memref<1x32xf32, #tpu.memory_space<vmem>>, vector<1x32xf32>
      %cst_92 = arith.constant dense<0.000000e+00> : vector<16xf32>
      %231 = vector.multi_reduction <add>, %224, %cst_92 [1] : vector<16x32xf32> to vector<16xf32>
      %232 = vector.shape_cast %231 : vector<16xf32> to vector<16x1xf32>
      %cst_93 = arith.constant 3.200000e+01 : f32
      %233 = vector.broadcast %cst_93 : f32 to vector<16x1xf32>
      %234 = arith.divf %232, %233 : vector<16x1xf32>
      %235 = vector.broadcast %234 : vector<16x1xf32> to vector<16x32xf32>
      %236 = arith.subf %224, %235 : vector<16x32xf32>
      %237 = arith.mulf %236, %236 : vector<16x32xf32>
      %cst_94 = arith.constant dense<0.000000e+00> : vector<16xf32>
      %238 = vector.multi_reduction <add>, %237, %cst_94 [1] : vector<16x32xf32> to vector<16xf32>
      %239 = vector.shape_cast %238 : vector<16xf32> to vector<16x1xf32>
      %cst_95 = arith.constant 3.100000e+01 : f32
      %240 = vector.broadcast %cst_95 : f32 to vector<16x1xf32>
      %241 = arith.divf %239, %240 : vector<16x1xf32>
      %242 = vector.broadcast %234 : vector<16x1xf32> to vector<16x32xf32>
      %243 = arith.subf %224, %242 : vector<16x32xf32>
      %244 = vector.broadcast %229 : vector<1x32xf32> to vector<16x32xf32>
      %245 = arith.mulf %244, %243 : vector<16x32xf32>
      %246 = math.sqrt %241 : vector<16x1xf32>
      %cst_96 = arith.constant 9.99999997E-7 : f32
      %247 = vector.broadcast %cst_96 : f32 to vector<16x1xf32>
      %248 = arith.addf %246, %247 : vector<16x1xf32>
      %249 = vector.broadcast %248 : vector<16x1xf32> to vector<16x32xf32>
      %250 = arith.divf %245, %249 : vector<16x32xf32>
      %251 = vector.broadcast %230 : vector<1x32xf32> to vector<16x32xf32>
      %252 = arith.addf %250, %251 : vector<16x32xf32>
      %253 = arith.truncf %252 : vector<16x32xf32> to vector<16x32xbf16>
      %c0_97 = arith.constant 0 : index
      %c0_98 = arith.constant 0 : index
      %254 = vector.load %arg16[%c0_97, %c0_98] : memref<16x32xbf16, #tpu.memory_space<vmem>>, vector<16x32xbf16>
      tpu.vector_store %arg16[%c0_97, %c0_98], %253 {strides = array<i32>} : memref<16x32xbf16, #tpu.memory_space<vmem>>, vector<16x32xbf16>,
    } else {
    }
    %c0 = arith.constant 0 : index
    %c0_1 = arith.constant 0 : index
    %3 = vector.load %arg16[%c0, %c0_1] : memref<16x32xbf16, #tpu.memory_space<vmem>>, vector<16x32xbf16>
    %c0_2 = arith.constant 0 : index
    %c0_3 = arith.constant 0 : index
    %4 = vector.load %arg11[%c0_2, %c0_3] : memref<32x1024xbf16, #tpu.memory_space<vmem>>, vector<32x1024xbf16>
    %cst = arith.constant dense<0.000000e+00> : vector<16x1024xf32>
    %5 = tpu.matmul %3, %4, %cst {dimension_numbers = #tpu.dot_dimension_numbers<[1], [0], [0], [1], [0, 0, 1, 1], [], []>} : vector<16x32xbf16>, vector<32x1024xbf16>, vector<16x1024xf32> -> vector<16x1024xf32>
    %c0_4 = arith.constant 0 : index
    %c0_5 = arith.constant 0 : index
    %6 = vector.load %arg12[%c0_4, %c0_5] : memref<1x1024xf32, #tpu.memory_space<vmem>>, vector<1x1024xf32>
    %7 = vector.broadcast %6 : vector<1x1024xf32> to vector<16x1024xf32>
    %8 = arith.addf %5, %7 : vector<16x1024xf32>
    %cst_6 = arith.constant 0.000000e+00 : f32
    %9 = vector.broadcast %cst_6 : f32 to vector<16x1024xf32>
    %10 = arith.maximumf %8, %9 : vector<16x1024xf32>
    %c0_7 = arith.constant 0 : index
    %c0_8 = arith.constant 0 : index
    %11 = vector.load %arg17[%c0_7, %c0_8] : memref<16x32xf32, #tpu.memory_space<vmem>>, vector<16x32xf32>
    %12 = arith.truncf %10 : vector<16x1024xf32> to vector<16x1024xbf16>
    %c0_9 = arith.constant 0 : index
    %c0_10 = arith.constant 0 : index
    %13 = vector.load %arg13[%c0_9, %c0_10] : memref<1024x32xbf16, #tpu.memory_space<vmem>>, vector<1024x32xbf16>
    %cst_11 = arith.constant dense<0.000000e+00> : vector<16x32xf32>
    %14 = tpu.matmul %12, %13, %cst_11 {dimension_numbers = #tpu.dot_dimension_numbers<[1], [0], [0], [1], [0, 0, 1, 1], [], []>} : vector<16x1024xbf16>, vector<1024x32xbf16>, vector<16x32xf32> -> vector<16x32xf32>
    %15 = arith.addf %11, %14 : vector<16x32xf32>
    %c0_12 = arith.constant 0 : index
    %c0_13 = arith.constant 0 : index
    %16 = vector.load %arg17[%c0_12, %c0_13] : memref<16x32xf32, #tpu.memory_space<vmem>>, vector<16x32xf32>
    tpu.vector_store %arg17[%c0_12, %c0_13], %15 {strides = array<i32>} : memref<16x32xf32, #tpu.memory_space<vmem>>, vector<16x32xf32>,
    %c1_i32 = arith.constant 1 : i32
    %17 = arith.cmpi eq, %arg0, %c1_i32 : i32
    %18 = arith.extui %17 : i1 to i32
    %c0_i32_14 = arith.constant 0 : i32
    %19 = arith.cmpi ne, %18, %c0_i32_14 : i32
    scf.if %19 {
      %c0_15 = arith.constant 0 : index
      %c0_16 = arith.constant 0 : index
      %20 = vector.load %arg17[%c0_15, %c0_16] : memref<16x32xf32, #tpu.memory_space<vmem>>, vector<16x32xf32>
      %c0_17 = arith.constant 0 : index
      %c0_18 = arith.constant 0 : index
      %21 = vector.load %arg15[%c0_17, %c0_18] : memref<16x32xf32, #tpu.memory_space<vmem>>, vector<16x32xf32>
      tpu.vector_store %arg15[%c0_17, %c0_18], %20 {strides = array<i32>} : memref<16x32xf32, #tpu.memory_space<vmem>>, vector<16x32xf32>,
    } else {
    }
    return
  }
  func.func @transform_0(%arg0: i32) -> (i32, i32) {
    %c0_i32 = arith.constant 0 : i32
    %c0_i32_0 = arith.constant 0 : i32
    %c0_i32_1 = arith.constant 0 : i32
    return %c0_i32, %c0_i32_0 : i32, i32
  }
  func.func @transform_1(%arg0: i32) -> (i32, i32, i32) {
    %c0_i32 = arith.constant 0 : i32
    %c0_i32_0 = arith.constant 0 : i32
    %c0_i32_1 = arith.constant 0 : i32
    %c0_i32_2 = arith.constant 0 : i32
    return %c0_i32, %c0_i32_0, %c0_i32_1 : i32, i32, i32
  }
  func.func @transform_2(%arg0: i32) -> (i32, i32) {
    %c0_i32 = arith.constant 0 : i32
    %c0_i32_0 = arith.constant 0 : i32
    %c0_i32_1 = arith.constant 0 : i32
    return %c0_i32, %c0_i32_0 : i32, i32
  }
  func.func @transform_3(%arg0: i32) -> (i32, i32) {
    %c0_i32 = arith.constant 0 : i32
    %c0_i32_0 = arith.constant 0 : i32
    %c0_i32_1 = arith.constant 0 : i32
    return %c0_i32, %c0_i32_0 : i32, i32
  }
  func.func @transform_4(%arg0: i32) -> (i32, i32) {
    %c0_i32 = arith.constant 0 : i32
    %c0_i32_0 = arith.constant 0 : i32
    %c0_i32_1 = arith.constant 0 : i32
    return %c0_i32, %c0_i32_0 : i32, i32
  }
  func.func @transform_5(%arg0: i32) -> (i32, i32) {
    %c0_i32 = arith.constant 0 : i32
    %c0_i32_0 = arith.constant 0 : i32
    %c0_i32_1 = arith.constant 0 : i32
    return %c0_i32, %c0_i32_0 : i32, i32
  }
  func.func @transform_6(%arg0: i32) -> (i32, i32) {
    %c0_i32 = arith.constant 0 : i32
    %c0_i32_0 = arith.constant 0 : i32
    %c0_i32_1 = arith.constant 0 : i32
    return %c0_i32, %c0_i32_0 : i32, i32
  }
  func.func @transform_7(%arg0: i32) -> (i32, i32) {
    %c0_i32 = arith.constant 0 : i32
    %c0_i32_0 = arith.constant 0 : i32
    %c0_i32_1 = arith.constant 0 : i32
    return %c0_i32, %c0_i32_0 : i32, i32
  }
  func.func @transform_8(%arg0: i32) -> (i32, i32) {
    %c0_i32 = arith.constant 0 : i32
    %c0_i32_0 = arith.constant 0 : i32
    %c0_i32_1 = arith.constant 0 : i32
    return %c0_i32, %c0_i32_0 : i32, i32
  }
  func.func @transform_9(%arg0: i32) -> (i32, i32) {
    %c0_i32 = arith.constant 0 : i32
    %c0_i32_0 = arith.constant 0 : i32
    %c0_i32_1 = arith.constant 0 : i32
    return %c0_i32, %c0_i32_0 : i32, i32
  }
  func.func @transform_10(%arg0: i32) -> (i32, i32) {
    %c0_i32 = arith.constant 0 : i32
    %c0_i32_0 = arith.constant 0 : i32
    return %c0_i32, %arg0 : i32, i32
  }
  func.func @transform_11(%arg0: i32) -> (i32, i32) {
    %c0_i32 = arith.constant 0 : i32
    %c0_i32_0 = arith.constant 0 : i32
    return %c0_i32, %arg0 : i32, i32
  }
  func.func @transform_12(%arg0: i32) -> (i32, i32) {
    %c0_i32 = arith.constant 0 : i32
    %c0_i32_0 = arith.constant 0 : i32
    return %arg0, %c0_i32 : i32, i32
  }
  func.func @transform_13(%arg0: i32) -> (i32, i32) {
    %c0_i32 = arith.constant 0 : i32
    %c0_i32_0 = arith.constant 0 : i32
    %c0_i32_1 = arith.constant 0 : i32
    return %c0_i32, %c0_i32_0 : i32, i32
  }
  func.func @transform_14(%arg0: i32) -> (i32, i32) {
    %c0_i32 = arith.constant 0 : i32
    %c0_i32_0 = arith.constant 0 : i32
    %c0_i32_1 = arith.constant 0 : i32
    return %c0_i32, %c0_i32_0 : i32, i32
  }
}

</mosaic_0001>

<llo_original>
// kernel: tpu_custom_call.1
$region0: #{tpu_custom_call.1}
  #allocation0 [shape = 'u32[]', space=smem, size = 0x4, offset = 0x4, fixed_abs, tag = 'smem constant byte address 0x4 - core index']
  #allocation1 [shape = 'u32[72,128]{1,0:T(1,128)}', space=vmem, size = 0x9000, scoped, tag = 'internal scratch']
  #allocation2 [shape = 'bf16[16,32]{1,0:T(8,128)(2,1)}', space=vmem, size = 0x1000, scoped, tag = 'scratch operand']
  #allocation3 [shape = 'f32[16,32]{1,0:T(8,128)}', space=vmem, size = 0x2000, scoped, tag = 'scratch operand']
  %s0 = inlined_call_operand.vmem [shape: f32[16,32], index: 0, kind: input, shape index: {}]
  %s1 = inlined_call_operand.vmem [shape: s32[2,1,8], index: 1, kind: input, shape index: {}]
  %s2 = inlined_call_operand.vmem [shape: f32[1,32], index: 2, kind: input, shape index: {}]
  %s3 = inlined_call_operand.vmem [shape: f32[1,32], index: 3, kind: input, shape index: {}]
  %s4 = inlined_call_operand.vmem [shape: bf16[32,96], index: 4, kind: input, shape index: {}]
  %s5 = inlined_call_operand.vmem [shape: f32[1,96], index: 5, kind: input, shape index: {}]
  %s6 = inlined_call_operand.vmem [shape: bf16[32,32], index: 6, kind: input, shape index: {}]
  %s7 = inlined_call_operand.vmem [shape: f32[1,32], index: 7, kind: input, shape index: {}]
  %s8 = inlined_call_operand.vmem [shape: f32[1,32], index: 8, kind: input, shape index: {}]
  %s9 = inlined_call_operand.vmem [shape: f32[1,32], index: 9, kind: input, shape index: {}]
  %s10 = inlined_call_operand.vmem [shape: bf16[32,2048], index: 10, kind: input, shape index: {}]
  %s11 = inlined_call_operand.vmem [shape: f32[1,2048], index: 11, kind: input, shape index: {}]
  %s12 = inlined_call_operand.vmem [shape: bf16[2048,32], index: 12, kind: input, shape index: {}]
  %s13 = inlined_call_operand.vmem [shape: f32[1,32], index: 13, kind: input, shape index: {}]
  %s14 = inlined_call_operand.hbm [shape: f32[16,32], index: 14, kind: output, shape index: {}]
  %s15 = sld [smem:[#allocation0]]
  $region120: #{tpu_custom_call.1} parent=0
    _
  %s17 = ssub.s32 1, %s15
  %s18 = scalar_select 0, %s17, %s15
  $region1: #{tpu_custom_call.1} parent=0
    #allocation4 [shape = 'u8[131072]{0}', space=vmem, size = 0x20000, scoped, tag = 'input window, operand 10']
    #allocation5 [shape = 'u8[8192]{0}', space=vmem, size = 0x2000, scoped, tag = 'output window, operand 0, single buffered']
    #allocation6 [shape = 's32[2]{0}', space=sflag, size = 0x8, scoped, tag = 'scoped memory for tpu_custom_call.1']
    %19 = vsyncpa [#allocation6], 0
    loop: start=0, step=1, limit=4
    $region2: #{tpu_custom_call.1} parent=1 // loop_pre_header
      _
    $region3: #{tpu_custom_call.1} parent=1 // loop_header
      %s21 = sphi 0, %s25
      %p22 = scmp.ge.s32.totalorder %s21, 4
      %s29 = sphi 0, %s29
      %s31 = sphi 0, %s29
      %s32 = sphi 0, %s31
      %s46 = sphi 0, %s32
      %s50 = sphi 0, %s50
      %s52 = sphi 0, %s50
      %s53 = sphi 0, %s52
      %s67 = sphi 0, %s53
      %s71 = sphi 0, %s71
      %s73 = sphi 0, %s71
      %s74 = sphi 0, %s73
      %s88 = sphi 0, %s74
      %s92 = sphi 0, %s92
      %s94 = sphi 0, %s92
      %s95 = sphi 0, %s94
      %s109 = sphi 0, %s95
      %s113 = sphi 0, %s113
      %s115 = sphi 0, %s113
      %s116 = sphi 0, %s115
      %s130 = sphi 0, %s116
      %s134 = sphi 0, %s134
      %s136 = sphi 0, %s134
      %s137 = sphi 0, %s136
      %s151 = sphi 0, %s137
      %s155 = sphi 0, %s155
      %s157 = sphi 0, %s155
      %s158 = sphi 0, %s157
      %s172 = sphi 0, %s158
      %s176 = sphi 0, %s176
      %s178 = sphi 0, %s176
      %s179 = sphi 0, %s178
      %s193 = sphi 0, %s179
      %s197 = sphi 0, %s197
      %s199 = sphi 0, %s197
      %s200 = sphi 0, %s199
      %s214 = sphi 0, %s200
      %s218 = sphi 0, %s218
      %s220 = sphi 0, %s218
      %s221 = sphi 0, %s220
      %s235 = sphi 0, %s221
      %s241 = sphi 0, %s243
      %s244 = sphi 0, %s241
      %s245 = sphi 0, %s244
      %s261 = sphi 0, %s245
      %s267 = sphi 0, %s269
      %s270 = sphi 0, %s267
      %s271 = sphi 0, %s270
      %s287 = sphi 0, %s271
      %s293 = sphi 0, %s295
      %s296 = sphi 0, %s293
      %s297 = sphi 0, %s296
      %s313 = sphi 0, %s297
      %s317 = sphi 0, %s317
      %s319 = sphi 0, %s317
      %s320 = sphi 0, %s319
      %s334 = sphi 0, %s320
      %s338 = sphi 0, %s338
      %s340 = sphi 0, %s338
      %s341 = sphi 0, %s340
      %s355 = sphi 0, %s341
    $region4: #{tpu_custom_call.1} parent=1 // loop_header_branch
      %24 = sbr.rel (%p22) target = $region8
    $region5: #{tpu_custom_call.1} parent=1 // loop_body
      %s26 = ssub.s32 %s21, 1
      %s27 = ssub.s32 %s21, 2
      %s28 = sadd.s32 %s21, 1
      %s30 = sadd.s32 %s29, 1
      %p33 = scmp.eq.s32.totalorder %s21, 1
      %p34 = scmp.ne.s32.totalorder %s29, %s31
      %p35 = scmp.eq.s32.totalorder %s21, 0
      %p36 = por %p34, %p35
      %p37 = scmp.ne.s32.totalorder %s29, %s31
      %p38 = scmp.eq.s32.totalorder %s26, 1
      %p39 = por %p37, %p38
      %p40 = scmp.ne.s32.totalorder %s31, %s32
      %p41 = scmp.eq.s32.totalorder %s26, 0
      %p42 = por %p40, %p41
      %p43 = scmp.ne.s32.totalorder %s31, %s32
      %p44 = scmp.eq.s32.totalorder %s27, 1
      %p45 = por %p43, %p44
      %p47 = scmp.ne.s32.totalorder %s32, %s46
      %p48 = scmp.eq.s32.totalorder %s27, 0
      %p49 = por %p47, %p48
      %s51 = sadd.s32 %s50, 1
      %p54 = scmp.eq.s32.totalorder %s21, 1
      %p55 = scmp.ne.s32.totalorder %s50, %s52
      %p56 = scmp.eq.s32.totalorder %s21, 0
      %p57 = por %p55, %p56
      %p58 = scmp.ne.s32.totalorder %s50, %s52
      %p59 = scmp.eq.s32.totalorder %s26, 1
      %p60 = por %p58, %p59
      %p61 = scmp.ne.s32.totalorder %s52, %s53
      %p62 = scmp.eq.s32.totalorder %s26, 0
      %p63 = por %p61, %p62
      %p64 = scmp.ne.s32.totalorder %s52, %s53
      %p65 = scmp.eq.s32.totalorder %s27, 1
      %p66 = por %p64, %p65
      %p68 = scmp.ne.s32.totalorder %s53, %s67
      %p69 = scmp.eq.s32.totalorder %s27, 0
      %p70 = por %p68, %p69
      %s72 = sadd.s32 %s71, 1
      %p75 = scmp.eq.s32.totalorder %s21, 1
      %p76 = scmp.ne.s32.totalorder %s71, %s73
      %p77 = scmp.eq.s32.totalorder %s21, 0
      %p78 = por %p76, %p77
      %p79 = scmp.ne.s32.totalorder %s71, %s73
      %p80 = scmp.eq.s32.totalorder %s26, 1
      %p81 = por %p79, %p80
      %p82 = scmp.ne.s32.totalorder %s73, %s74
      %p83 = scmp.eq.s32.totalorder %s26, 0
      %p84 = por %p82, %p83
      %p85 = scmp.ne.s32.totalorder %s73, %s74
      %p86 = scmp.eq.s32.totalorder %s27, 1
      %p87 = por %p85, %p86
      %p89 = scmp.ne.s32.totalorder %s74, %s88
      %p90 = scmp.eq.s32.totalorder %s27, 0
      %p91 = por %p89, %p90
      %s93 = sadd.s32 %s92, 1
      %p96 = scmp.eq.s32.totalorder %s21, 1
      %p97 = scmp.ne.s32.totalorder %s92, %s94
      %p98 = scmp.eq.s32.totalorder %s21, 0
      %p99 = por %p97, %p98
      %p100 = scmp.ne.s32.totalorder %s92, %s94
      %p101 = scmp.eq.s32.totalorder %s26, 1
      %p102 = por %p100, %p101
      %p103 = scmp.ne.s32.totalorder %s94, %s95
      %p104 = scmp.eq.s32.totalorder %s26, 0
      %p105 = por %p103, %p104
      %p106 = scmp.ne.s32.totalorder %s94, %s95
      %p107 = scmp.eq.s32.totalorder %s27, 1
      %p108 = por %p106, %p107
      %p110 = scmp.ne.s32.totalorder %s95, %s109
      %p111 = scmp.eq.s32.totalorder %s27, 0
      %p112 = por %p110, %p111
      %s114 = sadd.s32 %s113, 1
      %p117 = scmp.eq.s32.totalorder %s21, 1
      %p118 = scmp.ne.s32.totalorder %s113, %s115
      %p119 = scmp.eq.s32.totalorder %s21, 0
      %p120 = por %p118, %p119
      %p121 = scmp.ne.s32.totalorder %s113, %s115
      %p122 = scmp.eq.s32.totalorder %s26, 1
      %p123 = por %p121, %p122
      %p124 = scmp.ne.s32.totalorder %s115, %s116
      %p125 = scmp.eq.s32.totalorder %s26, 0
      %p126 = por %p124, %p125
      %p127 = scmp.ne.s32.totalorder %s115, %s116
      %p128 = scmp.eq.s32.totalorder %s27, 1
      %p129 = por %p127, %p128
      %p131 = scmp.ne.s32.totalorder %s116, %s130
      %p132 = scmp.eq.s32.totalorder %s27, 0
      %p133 = por %p131, %p132
      %s135 = sadd.s32 %s134, 1
      %p138 = scmp.eq.s32.totalorder %s21, 1
      %p139 = scmp.ne.s32.totalorder %s134, %s136
      %p140 = scmp.eq.s32.totalorder %s21, 0
      %p141 = por %p139, %p140
      %p142 = scmp.ne.s32.totalorder %s134, %s136
      %p143 = scmp.eq.s32.totalorder %s26, 1
      %p144 = por %p142, %p143
      %p145 = scmp.ne.s32.totalorder %s136, %s137
      %p146 = scmp.eq.s32.totalorder %s26, 0
      %p147 = por %p145, %p146
      %p148 = scmp.ne.s32.totalorder %s136, %s137
      %p149 = scmp.eq.s32.totalorder %s27, 1
      %p150 = por %p148, %p149
      %p152 = scmp.ne.s32.totalorder %s137, %s151
      %p153 = scmp.eq.s32.totalorder %s27, 0
      %p154 = por %p152, %p153
      %s156 = sadd.s32 %s155, 1
      %p159 = scmp.eq.s32.totalorder %s21, 1
      %p160 = scmp.ne.s32.totalorder %s155, %s157
      %p161 = scmp.eq.s32.totalorder %s21, 0
      %p162 = por %p160, %p161
      %p163 = scmp.ne.s32.totalorder %s155, %s157
      %p164 = scmp.eq.s32.totalorder %s26, 1
      %p165 = por %p163, %p164
      %p166 = scmp.ne.s32.totalorder %s157, %s158
      %p167 = scmp.eq.s32.totalorder %s26, 0
      %p168 = por %p166, %p167
      %p169 = scmp.ne.s32.totalorder %s157, %s158
      %p170 = scmp.eq.s32.totalorder %s27, 1
      %p171 = por %p169, %p170
      %p173 = scmp.ne.s32.totalorder %s158, %s172
      %p174 = scmp.eq.s32.totalorder %s27, 0
      %p175 = por %p173, %p174
      %s177 = sadd.s32 %s176, 1
      %p180 = scmp.eq.s32.totalorder %s21, 1
      %p181 = scmp.ne.s32.totalorder %s176, %s178
      %p182 = scmp.eq.s32.totalorder %s21, 0
      %p183 = por %p181, %p182
      %p184 = scmp.ne.s32.totalorder %s176, %s178
      %p185 = scmp.eq.s32.totalorder %s26, 1
      %p186 = por %p184, %p185
      %p187 = scmp.ne.s32.totalorder %s178, %s179
      %p188 = scmp.eq.s32.totalorder %s26, 0
      %p189 = por %p187, %p188
      %p190 = scmp.ne.s32.totalorder %s178, %s179
      %p191 = scmp.eq.s32.totalorder %s27, 1
      %p192 = por %p190, %p191
      %p194 = scmp.ne.s32.totalorder %s179, %s193
      %p195 = scmp.eq.s32.totalorder %s27, 0
      %p196 = por %p194, %p195
      %s198 = sadd.s32 %s197, 1
      %p201 = scmp.eq.s32.totalorder %s21, 1
      %p202 = scmp.ne.s32.totalorder %s197, %s199
      %p203 = scmp.eq.s32.totalorder %s21, 0
      %p204 = por %p202, %p203
      %p205 = scmp.ne.s32.totalorder %s197, %s199
      %p206 = scmp.eq.s32.totalorder %s26, 1
      %p207 = por %p205, %p206
      %p208 = scmp.ne.s32.totalorder %s199, %s200
      %p209 = scmp.eq.s32.totalorder %s26, 0
      %p210 = por %p208, %p209
      %p211 = scmp.ne.s32.totalorder %s199, %s200
      %p212 = scmp.eq.s32.totalorder %s27, 1
      %p213 = por %p211, %p212
      %p215 = scmp.ne.s32.totalorder %s200, %s214
      %p216 = scmp.eq.s32.totalorder %s27, 0
      %p217 = por %p215, %p216
      %s219 = sadd.s32 %s218, 1
      %p222 = scmp.eq.s32.totalorder %s21, 1
      %p223 = scmp.ne.s32.totalorder %s218, %s220
      %p224 = scmp.eq.s32.totalorder %s21, 0
      %p225 = por %p223, %p224
      %p226 = scmp.ne.s32.totalorder %s218, %s220
      %p227 = scmp.eq.s32.totalorder %s26, 1
      %p228 = por %p226, %p227
      %p229 = scmp.ne.s32.totalorder %s220, %s221
      %p230 = scmp.eq.s32.totalorder %s26, 0
      %p231 = por %p229, %p230
      %p232 = scmp.ne.s32.totalorder %s220, %s221
      %p233 = scmp.eq.s32.totalorder %s27, 1
      %p234 = por %p232, %p233
      %p236 = scmp.ne.s32.totalorder %s221, %s235
      %p237 = scmp.eq.s32.totalorder %s27, 0
      %p238 = por %p236, %p237
      %s239 = ssub.s32 %s21, %s28
      %p240 = scmp.eq.s32.totalorder %s239, 0
      %s242 = sadd.s32 %s241, 1
      %s243 = scalar_select %p240, %s241, %s242
      %p246 = pneg %p240
      %p247 = scmp.eq.s32.totalorder %s21, 1
      %p248 = por %p246, %p247
      %p249 = scmp.ne.s32.totalorder %s241, %s244
      %p250 = scmp.eq.s32.totalorder %s21, 0
      %p251 = por %p249, %p250
      %p252 = scmp.ne.s32.totalorder %s241, %s244
      %p253 = scmp.eq.s32.totalorder %s26, 1
      %p254 = por %p252, %p253
      %p255 = scmp.ne.s32.totalorder %s244, %s245
      %p256 = scmp.eq.s32.totalorder %s26, 0
      %p257 = por %p255, %p256
      %p258 = scmp.ne.s32.totalorder %s244, %s245
      %p259 = scmp.eq.s32.totalorder %s27, 1
      %p260 = por %p258, %p259
      %p262 = scmp.ne.s32.totalorder %s245, %s261
      %p263 = scmp.eq.s32.totalorder %s27, 0
      %p264 = por %p262, %p263
      %s265 = ssub.s32 %s21, %s28
      %p266 = scmp.eq.s32.totalorder %s265, 0
      %s268 = sadd.s32 %s267, 1
      %s269 = scalar_select %p266, %s267, %s268
      %p272 = pneg %p266
      %p273 = scmp.eq.s32.totalorder %s21, 1
      %p274 = por %p272, %p273
      %p275 = scmp.ne.s32.totalorder %s267, %s270
      %p276 = scmp.eq.s32.totalorder %s21, 0
      %p277 = por %p275, %p276
      %p278 = scmp.ne.s32.totalorder %s267, %s270
      %p279 = scmp.eq.s32.totalorder %s26, 1
      %p280 = por %p278, %p279
      %p281 = scmp.ne.s32.totalorder %s270, %s271
      %p282 = scmp.eq.s32.totalorder %s26, 0
      %p283 = por %p281, %p282
      %p284 = scmp.ne.s32.totalorder %s270, %s271
      %p285 = scmp.eq.s32.totalorder %s27, 1
      %p286 = por %p284, %p285
      %p288 = scmp.ne.s32.totalorder %s271, %s287
      %p289 = scmp.eq.s32.totalorder %s27, 0
      %p290 = por %p288, %p289
      %s291 = ssub.s32 %s21, %s28
      %p292 = scmp.eq.s32.totalorder %s291, 0
      %s294 = sadd.s32 %s293, 1
      %s295 = scalar_select %p292, %s293, %s294
      %p298 = pneg %p292
      %p299 = scmp.eq.s32.totalorder %s21, 1
      %p300 = por %p298, %p299
      %p301 = scmp.ne.s32.totalorder %s293, %s296
      %p302 = scmp.eq.s32.totalorder %s21, 0
      %p303 = por %p301, %p302
      %p304 = scmp.ne.s32.totalorder %s293, %s296
      %p305 = scmp.eq.s32.totalorder %s26, 1
      %p306 = por %p304, %p305
      %p307 = scmp.ne.s32.totalorder %s296, %s297
      %p308 = scmp.eq.s32.totalorder %s26, 0
      %p309 = por %p307, %p308
      %p310 = scmp.ne.s32.totalorder %s296, %s297
      %p311 = scmp.eq.s32.totalorder %s27, 1
      %p312 = por %p310, %p311
      %p314 = scmp.ne.s32.totalorder %s297, %s313
      %p315 = scmp.eq.s32.totalorder %s27, 0
      %p316 = por %p314, %p315
      %s318 = sadd.s32 %s317, 1
      %p321 = scmp.eq.s32.totalorder %s21, 1
      %p322 = scmp.ne.s32.totalorder %s317, %s319
      %p323 = scmp.eq.s32.totalorder %s21, 0
      %p324 = por %p322, %p323
      %p325 = scmp.ne.s32.totalorder %s317, %s319
      %p326 = scmp.eq.s32.totalorder %s26, 1
      %p327 = por %p325, %p326
      %p328 = scmp.ne.s32.totalorder %s319, %s320
      %p329 = scmp.eq.s32.totalorder %s26, 0
      %p330 = por %p328, %p329
      %p331 = scmp.ne.s32.totalorder %s319, %s320
      %p332 = scmp.eq.s32.totalorder %s27, 1
      %p333 = por %p331, %p332
      %p335 = scmp.ne.s32.totalorder %s320, %s334
      %p336 = scmp.eq.s32.totalorder %s27, 0
      %p337 = por %p335, %p336
      %s339 = sadd.s32 %s338, 1
      %p342 = scmp.eq.s32.totalorder %s21, 1
      %p343 = scmp.ne.s32.totalorder %s338, %s340
      %p344 = scmp.eq.s32.totalorder %s21, 0
      %p345 = por %p343, %p344
      %p346 = scmp.ne.s32.totalorder %s338, %s340
      %p347 = scmp.eq.s32.totalorder %s26, 1
      %p348 = por %p346, %p347
      %p349 = scmp.ne.s32.totalorder %s340, %s341
      %p350 = scmp.eq.s32.totalorder %s26, 0
      %p351 = por %p349, %p350
      %p352 = scmp.ne.s32.totalorder %s340, %s341
      %p353 = scmp.eq.s32.totalorder %s27, 1
      %p354 = por %p352, %p353
      %p356 = scmp.ne.s32.totalorder %s341, %s355
      %p357 = scmp.eq.s32.totalorder %s27, 0
      %p358 = por %p356, %p357
      %p359 = scmp.le.s32.totalorder 1, %s21
      %p360 = scmp.lt.s32.totalorder %s21, 3
      %p361 = pnand %p359, %p360
      %p362 = pneg %p361
      // Predicated region
      $region9: #{tpu_custom_call.1} parent=5 // pred_check
        _
      $region10: #{tpu_custom_call.1} parent=5 // pred_check_branch
        %364 = sbr.rel (%p361) target = $region12
      $region11: #{tpu_custom_call.1} parent=5 // pred_region
        %s365 = ssub.s32 %s21, 1
        // Predicated region
        $region13: #{tpu_custom_call.1} parent=11 // pred_check
          %p366 = pneg %p42
        $region14: #{tpu_custom_call.1} parent=11 // pred_check_branch
          %368 = sbr.rel (%p366) target = $region16
        $region15: #{tpu_custom_call.1} parent=11 // pred_region
          _
        $region16: #{tpu_custom_call.1} parent=11 // pred_fallthru
          _
        // Predicated region
        $region17: #{tpu_custom_call.1} parent=11 // pred_check
          %p369 = pneg %p63
        $region18: #{tpu_custom_call.1} parent=11 // pred_check_branch
          %371 = sbr.rel (%p369) target = $region20
        $region19: #{tpu_custom_call.1} parent=11 // pred_region
          _
        $region20: #{tpu_custom_call.1} parent=11 // pred_fallthru
          _
        // Predicated region
        $region21: #{tpu_custom_call.1} parent=11 // pred_check
          %p372 = pneg %p84
        $region22: #{tpu_custom_call.1} parent=11 // pred_check_branch
          %374 = sbr.rel (%p372) target = $region24
        $region23: #{tpu_custom_call.1} parent=11 // pred_region
          _
        $region24: #{tpu_custom_call.1} parent=11 // pred_fallthru
          _
        // Predicated region
        $region25: #{tpu_custom_call.1} parent=11 // pred_check
          %p375 = pneg %p105
        $region26: #{tpu_custom_call.1} parent=11 // pred_check_branch
          %377 = sbr.rel (%p375) target = $region28
        $region27: #{tpu_custom_call.1} parent=11 // pred_region
          _
        $region28: #{tpu_custom_call.1} parent=11 // pred_fallthru
          _
        // Predicated region
        $region29: #{tpu_custom_call.1} parent=11 // pred_check
          %p378 = pneg %p126
        $region30: #{tpu_custom_call.1} parent=11 // pred_check_branch
          %380 = sbr.rel (%p378) target = $region32
        $region31: #{tpu_custom_call.1} parent=11 // pred_region
          _
        $region32: #{tpu_custom_call.1} parent=11 // pred_fallthru
          _
        // Predicated region
        $region33: #{tpu_custom_call.1} parent=11 // pred_check
          %p381 = pneg %p147
        $region34: #{tpu_custom_call.1} parent=11 // pred_check_branch
          %383 = sbr.rel (%p381) target = $region36
        $region35: #{tpu_custom_call.1} parent=11 // pred_region
          _
        $region36: #{tpu_custom_call.1} parent=11 // pred_fallthru
          _
        // Predicated region
        $region37: #{tpu_custom_call.1} parent=11 // pred_check
          %p384 = pneg %p168
        $region38: #{tpu_custom_call.1} parent=11 // pred_check_branch
          %386 = sbr.rel (%p384) target = $region40
        $region39: #{tpu_custom_call.1} parent=11 // pred_region
          _
        $region40: #{tpu_custom_call.1} parent=11 // pred_fallthru
          _
        // Predicated region
        $region41: #{tpu_custom_call.1} parent=11 // pred_check
          %p387 = pneg %p189
        $region42: #{tpu_custom_call.1} parent=11 // pred_check_branch
          %389 = sbr.rel (%p387) target = $region44
        $region43: #{tpu_custom_call.1} parent=11 // pred_region
          _
        $region44: #{tpu_custom_call.1} parent=11 // pred_fallthru
          _
        // Predicated region
        $region45: #{tpu_custom_call.1} parent=11 // pred_check
          %p390 = pneg %p210
        $region46: #{tpu_custom_call.1} parent=11 // pred_check_branch
          %392 = sbr.rel (%p390) target = $region48
        $region47: #{tpu_custom_call.1} parent=11 // pred_region
          _
        $region48: #{tpu_custom_call.1} parent=11 // pred_fallthru
          _
        // Predicated region
        $region49: #{tpu_custom_call.1} parent=11 // pred_check
          %p393 = pneg %p231
        $region50: #{tpu_custom_call.1} parent=11 // pred_check_branch
          %395 = sbr.rel (%p393) target = $region52
        $region51: #{tpu_custom_call.1} parent=11 // pred_region
          _
        $region52: #{tpu_custom_call.1} parent=11 // pred_fallthru
          _
        // Predicated region
        $region53: #{tpu_custom_call.1} parent=11 // pred_check
          %p396 = pneg %p330
        $region54: #{tpu_custom_call.1} parent=11 // pred_check_branch
          %398 = sbr.rel (%p396) target = $region56
        $region55: #{tpu_custom_call.1} parent=11 // pred_region
          _
        $region56: #{tpu_custom_call.1} parent=11 // pred_fallthru
          _
      $region12: #{tpu_custom_call.1} parent=5 // pred_fallthru
        _
      %p399 = scmp.lt.s32.totalorder %s21, 2
      // Predicated region
      $region57: #{tpu_custom_call.1} parent=5 // pred_check
        %p400 = pneg %p399
      $region58: #{tpu_custom_call.1} parent=5 // pred_check_branch
        %402 = sbr.rel (%p400) target = $region60
      $region59: #{tpu_custom_call.1} parent=5 // pred_region
        // Predicated region
        $region61: #{tpu_custom_call.1} parent=59 // pred_check
          %p403 = pneg %p251
        $region62: #{tpu_custom_call.1} parent=59 // pred_check_branch
          %405 = sbr.rel (%p403) target = $region64
        $region63: #{tpu_custom_call.1} parent=59 // pred_region
          %s406 = sand.u32 %s241, 1
          %s407 = sand.u32 %s241, 1
          %s408 = smul.addr %s407, 128
          %s409 = scalar_lea.vmem [#allocation4], %s408
          %s410 = smul.u32 8, %s21
          %s411 = smul.addr %s410, 4
          %s412 = scalar_lea.vmem %s10, %s411
          // Predicated region
          $region65: #{tpu_custom_call.1} parent=63 // pred_check
            _
          $region66: #{tpu_custom_call.1} parent=63 // pred_check_branch
            %414 = sbr.rel (0) target = $region68
          $region67: #{tpu_custom_call.1} parent=63 // pred_region
            // Predicated region
            $region69: #{tpu_custom_call.1} parent=67 // pred_check
              _
            $region70: #{tpu_custom_call.1} parent=67 // pred_check_branch
              %416 = sbr.rel (0) target = $region72
            $region71: #{tpu_custom_call.1} parent=67 // pred_region
              loop: start=0, step=1, limit=1
              $region73: #{tpu_custom_call.1} parent=71 // loop_pre_header
                _
              $region74: #{tpu_custom_call.1} parent=71 // loop_header
                %s418 = sphi 0, %s422
                %p419 = scmp.ge.s32.totalorder %s418, 1
                %s423 = sphi %s412, %s412
                %s424 = sphi %s409, %s409
              $region75: #{tpu_custom_call.1} parent=71 // loop_header_branch
                %421 = sbr.rel (%p419) target = $region79
              $region76: #{tpu_custom_call.1} parent=71 // loop_body
                %v425 = vld [vmem:[%s423] sm:$0xff]
                %426 = vst [vmem:[%s424] sm:$0xff] %v425
                %v427 = vld [vmem:[%s423 + $0x8] sm:$0xff]
                %428 = vst [vmem:[%s424 + $0x8] sm:$0xff] %v427
                %v429 = vld [vmem:[%s423 + $0x10] sm:$0xff]
                %430 = vst [vmem:[%s424 + $0x10] sm:$0xff] %v429
                %v431 = vld [vmem:[%s423 + $0x18] sm:$0xff]
                %432 = vst [vmem:[%s424 + $0x18] sm:$0xff] %v431
                %v433 = vld [vmem:[%s423 + $0x40] sm:$0xff]
                %434 = vst [vmem:[%s424 + $0x20] sm:$0xff] %v433
                %v435 = vld [vmem:[%s423 + $0x48] sm:$0xff]
                %436 = vst [vmem:[%s424 + $0x28] sm:$0xff] %v435
                %v437 = vld [vmem:[%s423 + $0x50] sm:$0xff]
                %438 = vst [vmem:[%s424 + $0x30] sm:$0xff] %v437
                %v439 = vld [vmem:[%s423 + $0x58] sm:$0xff]
                %440 = vst [vmem:[%s424 + $0x38] sm:$0xff] %v439
                %v441 = vld [vmem:[%s423 + $0x80] sm:$0xff]
                %442 = vst [vmem:[%s424 + $0x40] sm:$0xff] %v441
                %v443 = vld [vmem:[%s423 + $0x88] sm:$0xff]
                %444 = vst [vmem:[%s424 + $0x48] sm:$0xff] %v443
                %v445 = vld [vmem:[%s423 + $0x90] sm:$0xff]
                %446 = vst [vmem:[%s424 + $0x50] sm:$0xff] %v445
                %v447 = vld [vmem:[%s423 + $0x98] sm:$0xff]
                %448 = vst [vmem:[%s424 + $0x58] sm:$0xff] %v447
                %v449 = vld [vmem:[%s423 + $0xc0] sm:$0xff]
                %450 = vst [vmem:[%s424 + $0x60] sm:$0xff] %v449
                %v451 = vld [vmem:[%s423 + $0xc8] sm:$0xff]
                %452 = vst [vmem:[%s424 + $0x68] sm:$0xff] %v451
                %v453 = vld [vmem:[%s423 + $0xd0] sm:$0xff]
                %454 = vst [vmem:[%s424 + $0x70] sm:$0xff] %v453
                %v455 = vld [vmem:[%s423 + $0xd8] sm:$0xff]
                %456 = vst [vmem:[%s424 + $0x78] sm:$0xff] %v455
              $region77: #{tpu_custom_call.1} parent=71 // loop_footer
                %s422 = sadd.s32 1, %s418
              $region78: #{tpu_custom_call.1} parent=71 // loop_footer_branch
                %417 = sbr.rel target = $region74
              $region79: #{tpu_custom_call.1} parent=71 // loop_exit
                _
            $region72: #{tpu_custom_call.1} parent=67 // pred_fallthru
              _
            // Predicated region
            $region80: #{tpu_custom_call.1} parent=67 // pred_check
              _
            $region81: #{tpu_custom_call.1} parent=67 // pred_check_branch
              %458 = sbr.rel target = $region83
            $region82: #{tpu_custom_call.1} parent=67 // pred_region
              _
            $region83: #{tpu_custom_call.1} parent=67 // pred_fallthru
              _
          $region68: #{tpu_custom_call.1} parent=63 // pred_fallthru
            _
          %459 = vnop
        $region64: #{tpu_custom_call.1} parent=59 // pred_fallthru
          _
        // Predicated region
        $region84: #{tpu_custom_call.1} parent=59 // pred_check
          %p460 = pneg %p277
        $region85: #{tpu_custom_call.1} parent=59 // pred_check_branch
          %462 = sbr.rel (%p460) target = $region87
        $region86: #{tpu_custom_call.1} parent=59 // pred_region
          %s463 = smul.u32 8, %s21
          %p464 = scmp.lt.s32.totalorder %s463, 15
          %s465 = scalar_select %p464, %s463, 15
          %s466 = scalar_lea.vmem %s11, %s465
          %s467 = smul.u32 8, %s21
        $region87: #{tpu_custom_call.1} parent=59 // pred_fallthru
          _
        // Predicated region
        $region88: #{tpu_custom_call.1} parent=59 // pred_check
          %p468 = pneg %p303
        $region89: #{tpu_custom_call.1} parent=59 // pred_check_branch
          %470 = sbr.rel (%p468) target = $region91
        $region90: #{tpu_custom_call.1} parent=59 // pred_region
          %s471 = smul.u32 128, %s21
          %p472 = scmp.lt.s32.totalorder %s471, 255
          %s473 = scalar_select %p472, %s471, 255
          %s474 = smul.addr %s473, 4
          %s475 = scalar_lea.vmem %s12, %s474
          %s476 = smul.u32 128, %s21
        $region91: #{tpu_custom_call.1} parent=59 // pred_fallthru
          _
      $region60: #{tpu_custom_call.1} parent=5 // pred_fallthru
        _
      %p477 = scmp.le.s32.totalorder 1, %s21
      %p478 = scmp.lt.s32.totalorder %s21, 3
      %p479 = pnand %p477, %p478
      %p480 = pneg %p479
      // Predicated region
      $region92: #{tpu_custom_call.1} parent=5 // pred_check
        _
      $region93: #{tpu_custom_call.1} parent=5 // pred_check_branch
        %482 = sbr.rel (%p479) target = $region95
      $region94: #{tpu_custom_call.1} parent=5 // pred_region
        %s483 = ssub.s32 %s21, 1
        %s484 = sand.u32 %s244, 1
        %s485 = sand.u32 %s244, 1
        %s486 = smul.addr %s485, 128
        %s487 = scalar_lea.vmem [#allocation4], %s486
        // Predicated region
        $region96: #{tpu_custom_call.1} parent=94 // pred_check
          %p488 = pneg %p257
        $region97: #{tpu_custom_call.1} parent=94 // pred_check_branch
          %490 = sbr.rel (%p488) target = $region99
        $region98: #{tpu_custom_call.1} parent=94 // pred_region
          _
        $region99: #{tpu_custom_call.1} parent=94 // pred_fallthru
          _
        %p491 = pneg %p42
        %p492 = pneg %p39
        %p493 = pneg %p63
        %p494 = pneg %p60
        %p495 = pneg %p84
        %p496 = pneg %p81
        %p497 = pneg %p105
        %p498 = pneg %p102
        %p499 = pneg %p126
        %p500 = pneg %p123
        %p501 = pneg %p147
        %p502 = pneg %p144
        %p503 = pneg %p168
        %p504 = pneg %p165
        %p505 = pneg %p189
        %p506 = pneg %p186
        %p507 = pneg %p210
        %p508 = pneg %p207
        %p509 = pneg %p231
        %p510 = pneg %p228
        %s511 = sand.u32 %s244, 1
        %s512 = sand.u32 %s244, 1
        %s513 = smul.addr %s512, 128
        %s514 = scalar_lea.vmem [#allocation4], %s513
        %p515 = pneg %p257
        %p516 = pneg %p254
        %s517 = smul.u32 8, %s26
        %p518 = scmp.lt.s32.totalorder %s517, 15
        %s519 = scalar_select %p518, %s517, 15
        %s520 = scalar_lea.vmem %s11, %s519
        %p521 = pneg %p283
        %p522 = pneg %p280
        %s523 = smul.u32 128, %s26
        %p524 = scmp.lt.s32.totalorder %s523, 255
        %s525 = scalar_select %p524, %s523, 255
        %s526 = smul.addr %s525, 4
        %s527 = scalar_lea.vmem %s12, %s526
        %p528 = pneg %p309
        %p529 = pneg %p306
        %p530 = pneg %p330
        %p531 = pneg %p327
        %p532 = pneg %p351
        %p533 = pneg %p348
        %s534 = smul.u32 8, %s26
        %s535 = smul.u32 8, %s26
        %p536 = scmp.lt.s32.totalorder %s535, 15
        %s537 = scalar_select %p536, %s535, 15
        %s538 = scalar_lea.vmem %s11, %s537
        %s539 = smul.u32 8, %s26
        %s540 = smul.u32 128, %s26
        %p541 = scmp.lt.s32.totalorder %s540, 255
        %s542 = scalar_select %p541, %s540, 255
        %s543 = smul.addr %s542, 4
        %s544 = scalar_lea.vmem %s12, %s543
        %s545 = smul.u32 128, %s26
        %p547 = scmp.eq.s32.totalorder %s26, 0
        // Predicated region
        $region100: #{tpu_custom_call.1} parent=94 // pred_check
          %p548 = pneg %p547
        $region101: #{tpu_custom_call.1} parent=94 // pred_check_branch
          %550 = sbr.rel (%p548) target = $region103
        $region102: #{tpu_custom_call.1} parent=94 // pred_region
          %v551 = vld [vmem:[%s0] sm:$0xff]
          %v552 = vld [vmem:[%s0 + $0x8] sm:$0xff]
          %v553 = vld [vmem:[%s2] sm:$0x1]
          %v554 = vld [vmem:[%s3] sm:$0x1]
          %vm555 = vcmask 261120
          %v556 = vsel %vm555, %v551, 0.0
          %557 = vadd.xlane.f32.xlu0 %v556
          %v558 = vpop.xlane.xlu0 %557
          %v559 = vsel %vm555, %v552, 0.0
          %560 = vadd.xlane.f32.xlu0 %v559
          %v561 = vpop.xlane.xlu0 %560
          %v562 = vrcp.pop 32.0
          %v563 = vmul.f32 32.0, %v562
          %v564 = vsub.f32 1.0, %v563
          %v565 = vmul.f32 %v562, %v564
          %v566 = vadd.f32 %v562, %v565
          %vm567 = vweird.f32 %v562
          %v568 = vsel %vm567, %v562, %v566
          %v569 = vmul.f32 %v558, %v568
          %v570 = vmul.f32 %v561, %v568
          %v571 = vsub.f32 %v551, %v569
          %v572 = vsub.f32 %v552, %v570
          %v573 = vmul.f32 %v571, %v571
          %v574 = vmul.f32 %v572, %v572
          %v575 = vsel %vm555, %v573, 0.0
          %576 = vadd.xlane.f32.xlu0 %v575
          %v577 = vpop.xlane.xlu0 %576
          %v578 = vsel %vm555, %v574, 0.0
          %579 = vadd.xlane.f32.xlu0 %v578
          %v580 = vpop.xlane.xlu0 %579
          %v581 = vrcp.pop 31.0
          %v582 = vmul.f32 31.0, %v581
          %v583 = vsub.f32 1.0, %v582
          %v584 = vmul.f32 %v581, %v583
          %v585 = vadd.f32 %v581, %v584
          %vm586 = vweird.f32 %v581
          %v587 = vsel %vm586, %v581, %v585
          %v588 = vmul.f32 %v577, %v587
          %v589 = vmul.f32 %v580, %v587
          %v591 = vperm.slane %v553, 0
          %v593 = vmul.f32 %v591, %v571
          %v594 = vmul.f32 %v591, %v572
          %v595 = vrsqrt.pop %v588
          %v596 = vmul.f32 %v595, %v588
          %v597 = vmul.f32 %v596, %v595
          %v598 = vmul.f32 0.5, %v597
          %v599 = vsub.f32 1.5, %v598
          %v600 = vmul.f32 %v595, %v599
          %v601 = vmul.f32 %v588, %v600
          %vm602 = vcmp.eq.f32.partialorder %v588, inf
          %v603 = vsel %vm602, %v588, %v601
          %vm604 = vcmp.eq.f32.partialorder %v588, 0.0
          %v605 = vand.u32 %v588, 2147483648
          %v606 = vsel %vm604, %v605, %v603
          %v607 = vrsqrt.pop %v589
          %v608 = vmul.f32 %v607, %v589
          %v609 = vmul.f32 %v608, %v607
          %v610 = vmul.f32 0.5, %v609
          %v611 = vsub.f32 1.5, %v610
          %v612 = vmul.f32 %v607, %v611
          %v613 = vmul.f32 %v589, %v612
          %vm614 = vcmp.eq.f32.partialorder %v589, inf
          %v615 = vsel %vm614, %v589, %v613
          %vm616 = vcmp.eq.f32.partialorder %v589, 0.0
          %v617 = vand.u32 %v589, 2147483648
          %v618 = vsel %vm616, %v617, %v615
          %v619 = vadd.f32 %v606, 1e-06
          %v620 = vadd.f32 %v618, 1e-06
          %v621 = vrcp.pop %v619
          %v622 = vmul.f32 %v619, %v621
          %v623 = vsub.f32 1.0, %v622
          %v624 = vmul.f32 %v621, %v623
          %v625 = vadd.f32 %v621, %v624
          %vm626 = vweird.f32 %v619
          %vm627 = vweird.f32 %v621
          %vm628 = vmor %vm626, %vm627
          %v629 = vsel %vm628, %v621, %v625
          %v630 = vand.u32 2147483647, %v619
          %vm631 = vcmp.eq.f32.partialorder %v630, 8.507059e+37
          %v632 = vand.u32 %v619, 2147483648
          %v633 = vor.u32 1.1754944e-38, %v632
          %v634 = vsel %vm631, %v633, %v629
          %v635 = vmul.f32 %v593, %v634
          %v636 = vrcp.pop %v620
          %v637 = vmul.f32 %v620, %v636
          %v638 = vsub.f32 1.0, %v637
          %v639 = vmul.f32 %v636, %v638
          %v640 = vadd.f32 %v636, %v639
          %vm641 = vweird.f32 %v620
          %vm642 = vweird.f32 %v636
          %vm643 = vmor %vm641, %vm642
          %v644 = vsel %vm643, %v636, %v640
          %v645 = vand.u32 2147483647, %v620
          %vm646 = vcmp.eq.f32.partialorder %v645, 8.507059e+37
          %v647 = vand.u32 %v620, 2147483648
          %v648 = vor.u32 1.1754944e-38, %v647
          %v649 = vsel %vm646, %v648, %v644
          %v650 = vmul.f32 %v594, %v649
          %v652 = vperm.slane %v554, 0
          %v654 = vadd.f32 %v635, %v652
          %v655 = vadd.f32 %v650, %v652
          %v656 = vpack.c.bf16 %v655, %v654
          %v657 = vld [vmem:[%s4] sm:$0xf]
          %v658 = vld [vmem:[%s4 + $0x4] sm:$0xf]
          %v659 = vld [vmem:[%s4 + $0x8] sm:$0xf]
          %v660 = vld [vmem:[%s4 + $0xc] sm:$0xf]
          %v661 = vld [vmem:[%s5] sm:$0x1]
          %v663 = vperm.slane %v661, 0
          %v669 = vunpack.c.l.b16 %v657
          %v670 = vunpack.c.l.b16 %v658
          %v671 = vunpack.c.l.b16 %v659
          %v672 = vunpack.c.l.b16 %v660
          %v673 = vpack.c.b16 %v670, %v669
          %v674 = vpack.c.b16 %v672, %v671
          %v678 = vsel %vm555, %v656, 0
          %680 = vmatpush.bf16.msra.mxu0 0
          %681 = vmatpush.bf16.msra.mxu0 0
          %682 = vmatpush.bf16.msra.mxu0 0
          %683 = vmatpush.bf16.msra.mxu0 0
          %684 = vmatpush.bf16.msra.mxu0 0
          %685 = vmatpush.bf16.msra.mxu0 0
          %686 = vmatpush.bf16.msra.mxu0 %v674
          %687 = vmatpush.bf16.msra.mxu0 %v673
          %688 = vmatmul.bf16.gmra.mxu0 %v678
          %v689 = vpop.f32.mrf.mxu0
          %v690 = vadd.f32 %v663, %v689
          %v691 = vpop.f32.mrf.mxu0
          %v692 = vadd.f32 %v663, %v691
          %693 = vdwg.mxu0
          %v694 = vmul.f32 %v690, 0.35355338
          %v695 = vmul.f32 %v692, 0.35355338
          %v696 = vpack.c.bf16 %v694, %v694
          %v697 = vpack.c.bf16 %v695, %v695
          %v698 = vpack.c.bf16 %v690, %v690
          %v699 = vpack.c.bf16 %v692, %v692
          %v700 = vld [vmem:[%s1] sm:$0x1]
          %vm701 = vcmp.eq.s32.totalorder %v700, 0
          %v702 = vsel %vm701, 1, 0
          %v703 = vperm.slane %v702, 0
          %vm704 = vcmp.eq.s32.totalorder %v703, 1
          %v706 = vunpack.c.l.b16 %v698
          %v707 = vpack.c.b16 %v706, %v706
          %708 = vrot.lane.b32.xlu0 %v707, 96
          %v709 = vpop.permute.xlu0 %708
          %vm710 = vcmask 64512
          %v712 = vsel %vm710, %v696, 0
          %v715 = vsel %vm710, %v709, 0
          %717 = vmatpush.bf16.xpose.msra.mxu0 0
          %718 = vmatpush.bf16.xpose.msra.mxu0 0
          %719 = vmatpush.bf16.xpose.msra.mxu0 0
          %720 = vmatpush.bf16.xpose.msra.mxu0 0
          %721 = vmatpush.bf16.xpose.msra.mxu0 0
          %722 = vmatpush.bf16.xpose.msra.mxu0 0
          %723 = vmatpush.bf16.xpose.msra.mxu0 0
          %724 = vmatpush.bf16.xpose.msra.mxu0 %v715
          %725 = vmatmul.bf16.gmra.mxu0 %v712
          %v726 = vpop.f32.mrf.mxu0
          %v727 = vadd.f32 0.0, %v726
          %v728 = vpop.f32.mrf.mxu0
          %729 = vdwg.mxu0
          %v730 = vsel %vm704, -1e+09, %v727
          %v731 = vsel %vm710, %v730, -inf
          %732 = vmax.xlane.f32.xlu0 %v731
          %v733 = vpop.xlane.xlu0 %732
          %v734 = vsub.f32 %v730, %v733
          %v735 = vmul.f32 %v734, 1.442695
          %v736 = vpow.pop %v735
          %v737 = vsel %vm710, %v736, 0.0
          %738 = vadd.xlane.f32.xlu0 %v737
          %v739 = vpop.xlane.xlu0 %738
          %v740 = vrcp.pop %v739
          %v741 = vmul.f32 %v736, %v740
          %v742 = vpack.c.bf16 %v741, %v741
          %743 = vrot.lane.b32.xlu0 %v707, 64
          %v744 = vpop.permute.xlu0 %743
          %v746 = vsel %vm710, %v742, 0
          %vm748 = vcmask 1043456
          %v750 = vsel %vm748, %v744, 0
          %752 = vmatpush.bf16.msra.mxu0 0
          %753 = vmatpush.bf16.msra.mxu0 0
          %754 = vmatpush.bf16.msra.mxu0 0
          %755 = vmatpush.bf16.msra.mxu0 0
          %756 = vmatpush.bf16.msra.mxu0 0
          %757 = vmatpush.bf16.msra.mxu0 0
          %758 = vmatpush.bf16.msra.mxu0 0
          %759 = vmatpush.bf16.msra.mxu0 %v750
          %760 = vmatmul.bf16.gmra.mxu0 %v746
          %v761 = vpop.f32.mrf.mxu0
          %v762 = vadd.f32 0.0, %v761
          %v763 = vpop.f32.mrf.mxu0
          %764 = vdwg.mxu0
          %v766 = vunpack.c.l.b16 %v696
          %v767 = vpack.c.b16 %v766, %v766
          %768 = vrot.lane.b32.xlu0 %v767, 120
          %v769 = vpop.permute.xlu0 %768
          %770 = vrot.lane.b32.xlu0 %v707, 88
          %v771 = vpop.permute.xlu0 %770
          %v773 = vsel %vm710, %v769, 0
          %v776 = vsel %vm710, %v771, 0
          %778 = vmatpush.bf16.xpose.msra.mxu0 0
          %779 = vmatpush.bf16.xpose.msra.mxu0 0
          %780 = vmatpush.bf16.xpose.msra.mxu0 0
          %781 = vmatpush.bf16.xpose.msra.mxu0 0
          %782 = vmatpush.bf16.xpose.msra.mxu0 0
          %783 = vmatpush.bf16.xpose.msra.mxu0 0
          %784 = vmatpush.bf16.xpose.msra.mxu0 0
          %785 = vmatpush.bf16.xpose.msra.mxu0 %v776
          %786 = vmatmul.bf16.gmra.mxu0 %v773
          %v787 = vpop.f32.mrf.mxu0
          %v788 = vadd.f32 0.0, %v787
          %v789 = vpop.f32.mrf.mxu0
          %790 = vdwg.mxu0
          %v791 = vsel %vm704, -1e+09, %v788
          %v792 = vsel %vm710, %v791, -inf
          %793 = vmax.xlane.f32.xlu0 %v792
          %v794 = vpop.xlane.xlu0 %793
          %v795 = vsub.f32 %v791, %v794
          %v796 = vmul.f32 %v795, 1.442695
          %v797 = vpow.pop %v796
          %v798 = vsel %vm710, %v797, 0.0
          %799 = vadd.xlane.f32.xlu0 %v798
          %v800 = vpop.xlane.xlu0 %799
          %v801 = vrcp.pop %v800
          %v802 = vmul.f32 %v797, %v801
          %v803 = vpack.c.bf16 %v802, %v802
          %804 = vrot.lane.b32.xlu0 %v707, 56
          %v805 = vpop.permute.xlu0 %804
          %v807 = vsel %vm710, %v803, 0
          %v810 = vsel %vm748, %v805, 0
          %812 = vmatpush.bf16.msra.mxu0 0
          %813 = vmatpush.bf16.msra.mxu0 0
          %814 = vmatpush.bf16.msra.mxu0 0
          %815 = vmatpush.bf16.msra.mxu0 0
          %816 = vmatpush.bf16.msra.mxu0 0
          %817 = vmatpush.bf16.msra.mxu0 0
          %818 = vmatpush.bf16.msra.mxu0 0
          %819 = vmatpush.bf16.msra.mxu0 %v810
          %820 = vmatmul.bf16.gmra.mxu0 %v807
          %v821 = vpop.f32.mrf.mxu0
          %v822 = vadd.f32 0.0, %v821
          %v823 = vpop.f32.mrf.mxu0
          %824 = vdwg.mxu0
          %825 = vrot.lane.b32.xlu0 %v767, 112
          %v826 = vpop.permute.xlu0 %825
          %827 = vrot.lane.b32.xlu0 %v707, 80
          %v828 = vpop.permute.xlu0 %827
          %v830 = vsel %vm710, %v826, 0
          %v833 = vsel %vm710, %v828, 0
          %835 = vmatpush.bf16.xpose.msra.mxu0 0
          %836 = vmatpush.bf16.xpose.msra.mxu0 0
          %837 = vmatpush.bf16.xpose.msra.mxu0 0
          %838 = vmatpush.bf16.xpose.msra.mxu0 0
          %839 = vmatpush.bf16.xpose.msra.mxu0 0
          %840 = vmatpush.bf16.xpose.msra.mxu0 0
          %841 = vmatpush.bf16.xpose.msra.mxu0 0
          %842 = vmatpush.bf16.xpose.msra.mxu0 %v833
          %843 = vmatmul.bf16.gmra.mxu0 %v830
          %v844 = vpop.f32.mrf.mxu0
          %v845 = vadd.f32 0.0, %v844
          %v846 = vpop.f32.mrf.mxu0
          %847 = vdwg.mxu0
          %v848 = vsel %vm704, -1e+09, %v845
          %v849 = vsel %vm710, %v848, -inf
          %850 = vmax.xlane.f32.xlu0 %v849
          %v851 = vpop.xlane.xlu0 %850
          %v852 = vsub.f32 %v848, %v851
          %v853 = vmul.f32 %v852, 1.442695
          %v854 = vpow.pop %v853
          %v855 = vsel %vm710, %v854, 0.0
          %856 = vadd.xlane.f32.xlu0 %v855
          %v857 = vpop.xlane.xlu0 %856
          %v858 = vrcp.pop %v857
          %v859 = vmul.f32 %v854, %v858
          %v860 = vpack.c.bf16 %v859, %v859
          %861 = vrot.lane.b32.xlu0 %v707, 48
          %v862 = vpop.permute.xlu0 %861
          %v864 = vsel %vm710, %v860, 0
          %v867 = vsel %vm748, %v862, 0
          %869 = vmatpush.bf16.msra.mxu0 0
          %870 = vmatpush.bf16.msra.mxu0 0
          %871 = vmatpush.bf16.msra.mxu0 0
          %872 = vmatpush.bf16.msra.mxu0 0
          %873 = vmatpush.bf16.msra.mxu0 0
          %874 = vmatpush.bf16.msra.mxu0 0
          %875 = vmatpush.bf16.msra.mxu0 0
          %876 = vmatpush.bf16.msra.mxu0 %v867
          %877 = vmatmul.bf16.gmra.mxu0 %v864
          %v878 = vpop.f32.mrf.mxu0
          %v879 = vadd.f32 0.0, %v878
          %v880 = vpop.f32.mrf.mxu0
          %881 = vdwg.mxu0
          %882 = vrot.lane.b32.xlu0 %v767, 104
          %v883 = vpop.permute.xlu0 %882
          %884 = vrot.lane.b32.xlu0 %v707, 72
          %v885 = vpop.permute.xlu0 %884
          %v887 = vsel %vm710, %v883, 0
          %v890 = vsel %vm710, %v885, 0
          %892 = vmatpush.bf16.xpose.msra.mxu0 0
          %893 = vmatpush.bf16.xpose.msra.mxu0 0
          %894 = vmatpush.bf16.xpose.msra.mxu0 0
          %895 = vmatpush.bf16.xpose.msra.mxu0 0
          %896 = vmatpush.bf16.xpose.msra.mxu0 0
          %897 = vmatpush.bf16.xpose.msra.mxu0 0
          %898 = vmatpush.bf16.xpose.msra.mxu0 0
          %899 = vmatpush.bf16.xpose.msra.mxu0 %v890
          %900 = vmatmul.bf16.gmra.mxu0 %v887
          %v901 = vpop.f32.mrf.mxu0
          %v902 = vadd.f32 0.0, %v901
          %v903 = vpop.f32.mrf.mxu0
          %904 = vdwg.mxu0
          %v905 = vsel %vm704, -1e+09, %v902
          %v906 = vsel %vm710, %v905, -inf
          %907 = vmax.xlane.f32.xlu0 %v906
          %v908 = vpop.xlane.xlu0 %907
          %v909 = vsub.f32 %v905, %v908
          %v910 = vmul.f32 %v909, 1.442695
          %v911 = vpow.pop %v910
          %v912 = vsel %vm710, %v911, 0.0
          %913 = vadd.xlane.f32.xlu0 %v912
          %v914 = vpop.xlane.xlu0 %913
          %v915 = vrcp.pop %v914
          %v916 = vmul.f32 %v911, %v915
          %v917 = vpack.c.bf16 %v916, %v916
          %918 = vrot.lane.b32.xlu0 %v707, 40
          %v919 = vpop.permute.xlu0 %918
          %v921 = vsel %vm710, %v917, 0
          %v924 = vsel %vm748, %v919, 0
          %926 = vmatpush.bf16.msra.mxu0 0
          %927 = vmatpush.bf16.msra.mxu0 0
          %928 = vmatpush.bf16.msra.mxu0 0
          %929 = vmatpush.bf16.msra.mxu0 0
          %930 = vmatpush.bf16.msra.mxu0 0
          %931 = vmatpush.bf16.msra.mxu0 0
          %932 = vmatpush.bf16.msra.mxu0 0
          %933 = vmatpush.bf16.msra.mxu0 %v924
          %934 = vmatmul.bf16.gmra.mxu0 %v921
          %v935 = vpop.f32.mrf.mxu0
          %v936 = vadd.f32 0.0, %v935
          %v937 = vpop.f32.mrf.mxu0
          %938 = vdwg.mxu0
          %940 = vrot.lane.b32.xlu0 %v822, 8
          %v941 = vpop.permute.xlu0 %940
          %944 = vrot.lane.b32.xlu0 %v879, 16
          %v945 = vpop.permute.xlu0 %944
          %948 = vrot.lane.b32.xlu0 %v936, 24
          %v949 = vpop.permute.xlu0 %948
          %v951 = vsel %vm710, %v762, %v941
          %vm952 = vcmask 130048
          %v953 = vsel %vm952, %v951, %v945
          %vm954 = vcmask 195584
          %v955 = vsel %vm954, %v953, %v949
          %s956 = scalar_lea.vmem %s1, 1
          %v957 = vld [vmem:[%s956] sm:$0x1]
          %vm958 = vcmp.eq.s32.totalorder %v957, 0
          %v959 = vsel %vm958, 1, 0
          %v960 = vperm.slane %v959, 0
          %vm961 = vcmp.eq.s32.totalorder %v960, 1
          %v963 = vunpack.c.l.b16 %v699
          %v964 = vpack.c.b16 %v963, %v963
          %965 = vrot.lane.b32.xlu0 %v964, 96
          %v966 = vpop.permute.xlu0 %965
          %v968 = vsel %vm710, %v697, 0
          %v971 = vsel %vm710, %v966, 0
          %973 = vmatpush.bf16.xpose.msra.mxu0 0
          %974 = vmatpush.bf16.xpose.msra.mxu0 0
          %975 = vmatpush.bf16.xpose.msra.mxu0 0
          %976 = vmatpush.bf16.xpose.msra.mxu0 0
          %977 = vmatpush.bf16.xpose.msra.mxu0 0
          %978 = vmatpush.bf16.xpose.msra.mxu0 0
          %979 = vmatpush.bf16.xpose.msra.mxu0 0
          %980 = vmatpush.bf16.xpose.msra.mxu0 %v971
          %981 = vmatmul.bf16.gmra.mxu0 %v968
          %v982 = vpop.f32.mrf.mxu0
          %v983 = vadd.f32 0.0, %v982
          %v984 = vpop.f32.mrf.mxu0
          %985 = vdwg.mxu0
          %v986 = vsel %vm961, -1e+09, %v983
          %v987 = vsel %vm710, %v986, -inf
          %988 = vmax.xlane.f32.xlu0 %v987
          %v989 = vpop.xlane.xlu0 %988
          %v990 = vsub.f32 %v986, %v989
          %v991 = vmul.f32 %v990, 1.442695
          %v992 = vpow.pop %v991
          %v993 = vsel %vm710, %v992, 0.0
          %994 = vadd.xlane.f32.xlu0 %v993
          %v995 = vpop.xlane.xlu0 %994
          %v996 = vrcp.pop %v995
          %v997 = vmul.f32 %v992, %v996
          %v998 = vpack.c.bf16 %v997, %v997
          %999 = vrot.lane.b32.xlu0 %v964, 64
          %v1000 = vpop.permute.xlu0 %999
          %v1002 = vsel %vm710, %v998, 0
          %v1005 = vsel %vm748, %v1000, 0
          %1007 = vmatpush.bf16.msra.mxu0 0
          %1008 = vmatpush.bf16.msra.mxu0 0
          %1009 = vmatpush.bf16.msra.mxu0 0
          %1010 = vmatpush.bf16.msra.mxu0 0
          %1011 = vmatpush.bf16.msra.mxu0 0
          %1012 = vmatpush.bf16.msra.mxu0 0
          %1013 = vmatpush.bf16.msra.mxu0 0
          %1014 = vmatpush.bf16.msra.mxu0 %v1005
          %1015 = vmatmul.bf16.gmra.mxu0 %v1002
          %v1016 = vpop.f32.mrf.mxu0
          %v1017 = vadd.f32 0.0, %v1016
          %v1018 = vpop.f32.mrf.mxu0
          %1019 = vdwg.mxu0
          %v1021 = vunpack.c.l.b16 %v697
          %v1022 = vpack.c.b16 %v1021, %v1021
          %1023 = vrot.lane.b32.xlu0 %v1022, 120
          %v1024 = vpop.permute.xlu0 %1023
          %1025 = vrot.lane.b32.xlu0 %v964, 88
          %v1026 = vpop.permute.xlu0 %1025
          %v1028 = vsel %vm710, %v1024, 0
          %v1031 = vsel %vm710, %v1026, 0
          %1033 = vmatpush.bf16.xpose.msra.mxu0 0
          %1034 = vmatpush.bf16.xpose.msra.mxu0 0
          %1035 = vmatpush.bf16.xpose.msra.mxu0 0
          %1036 = vmatpush.bf16.xpose.msra.mxu0 0
          %1037 = vmatpush.bf16.xpose.msra.mxu0 0
          %1038 = vmatpush.bf16.xpose.msra.mxu0 0
          %1039 = vmatpush.bf16.xpose.msra.mxu0 0
          %1040 = vmatpush.bf16.xpose.msra.mxu0 %v1031
          %1041 = vmatmul.bf16.gmra.mxu0 %v1028
          %v1042 = vpop.f32.mrf.mxu0
          %v1043 = vadd.f32 0.0, %v1042
          %v1044 = vpop.f32.mrf.mxu0
          %1045 = vdwg.mxu0
          %v1046 = vsel %vm961, -1e+09, %v1043
          %v1047 = vsel %vm710, %v1046, -inf
          %1048 = vmax.xlane.f32.xlu0 %v1047
          %v1049 = vpop.xlane.xlu0 %1048
          %v1050 = vsub.f32 %v1046, %v1049
          %v1051 = vmul.f32 %v1050, 1.442695
          %v1052 = vpow.pop %v1051
          %v1053 = vsel %vm710, %v1052, 0.0
          %1054 = vadd.xlane.f32.xlu0 %v1053
          %v1055 = vpop.xlane.xlu0 %1054
          %v1056 = vrcp.pop %v1055
          %v1057 = vmul.f32 %v1052, %v1056
          %v1058 = vpack.c.bf16 %v1057, %v1057
          %1059 = vrot.lane.b32.xlu0 %v964, 56
          %v1060 = vpop.permute.xlu0 %1059
          %v1062 = vsel %vm710, %v1058, 0
          %v1065 = vsel %vm748, %v1060, 0
          %1067 = vmatpush.bf16.msra.mxu0 0
          %1068 = vmatpush.bf16.msra.mxu0 0
          %1069 = vmatpush.bf16.msra.mxu0 0
          %1070 = vmatpush.bf16.msra.mxu0 0
          %1071 = vmatpush.bf16.msra.mxu0 0
          %1072 = vmatpush.bf16.msra.mxu0 0
          %1073 = vmatpush.bf16.msra.mxu0 0
          %1074 = vmatpush.bf16.msra.mxu0 %v1065
          %1075 = vmatmul.bf16.gmra.mxu0 %v1062
          %v1076 = vpop.f32.mrf.mxu0
          %v1077 = vadd.f32 0.0, %v1076
          %v1078 = vpop.f32.mrf.mxu0
          %1079 = vdwg.mxu0
          %1080 = vrot.lane.b32.xlu0 %v1022, 112
          %v1081 = vpop.permute.xlu0 %1080
          %1082 = vrot.lane.b32.xlu0 %v964, 80
          %v1083 = vpop.permute.xlu0 %1082
          %v1085 = vsel %vm710, %v1081, 0
          %v1088 = vsel %vm710, %v1083, 0
          %1090 = vmatpush.bf16.xpose.msra.mxu0 0
          %1091 = vmatpush.bf16.xpose.msra.mxu0 0
          %1092 = vmatpush.bf16.xpose.msra.mxu0 0
          %1093 = vmatpush.bf16.xpose.msra.mxu0 0
          %1094 = vmatpush.bf16.xpose.msra.mxu0 0
          %1095 = vmatpush.bf16.xpose.msra.mxu0 0
          %1096 = vmatpush.bf16.xpose.msra.mxu0 0
          %1097 = vmatpush.bf16.xpose.msra.mxu0 %v1088
          %1098 = vmatmul.bf16.gmra.mxu0 %v1085
          %v1099 = vpop.f32.mrf.mxu0
          %v1100 = vadd.f32 0.0, %v1099
          %v1101 = vpop.f32.mrf.mxu0
          %1102 = vdwg.mxu0
          %v1103 = vsel %vm961, -1e+09, %v1100
          %v1104 = vsel %vm710, %v1103, -inf
          %1105 = vmax.xlane.f32.xlu0 %v1104
          %v1106 = vpop.xlane.xlu0 %1105
          %v1107 = vsub.f32 %v1103, %v1106
          %v1108 = vmul.f32 %v1107, 1.442695
          %v1109 = vpow.pop %v1108
          %v1110 = vsel %vm710, %v1109, 0.0
          %1111 = vadd.xlane.f32.xlu0 %v1110
          %v1112 = vpop.xlane.xlu0 %1111
          %v1113 = vrcp.pop %v1112
          %v1114 = vmul.f32 %v1109, %v1113
          %v1115 = vpack.c.bf16 %v1114, %v1114
          %1116 = vrot.lane.b32.xlu0 %v964, 48
          %v1117 = vpop.permute.xlu0 %1116
          %v1119 = vsel %vm710, %v1115, 0
          %v1122 = vsel %vm748, %v1117, 0
          %1124 = vmatpush.bf16.msra.mxu0 0
          %1125 = vmatpush.bf16.msra.mxu0 0
          %1126 = vmatpush.bf16.msra.mxu0 0
          %1127 = vmatpush.bf16.msra.mxu0 0
          %1128 = vmatpush.bf16.msra.mxu0 0
          %1129 = vmatpush.bf16.msra.mxu0 0
          %1130 = vmatpush.bf16.msra.mxu0 0
          %1131 = vmatpush.bf16.msra.mxu0 %v1122
          %1132 = vmatmul.bf16.gmra.mxu0 %v1119
          %v1133 = vpop.f32.mrf.mxu0
          %v1134 = vadd.f32 0.0, %v1133
          %v1135 = vpop.f32.mrf.mxu0
          %1136 = vdwg.mxu0
          %1137 = vrot.lane.b32.xlu0 %v1022, 104
          %v1138 = vpop.permute.xlu0 %1137
          %1139 = vrot.lane.b32.xlu0 %v964, 72
          %v1140 = vpop.permute.xlu0 %1139
          %v1142 = vsel %vm710, %v1138, 0
          %v1145 = vsel %vm710, %v1140, 0
          %1147 = vmatpush.bf16.xpose.msra.mxu0 0
          %1148 = vmatpush.bf16.xpose.msra.mxu0 0
          %1149 = vmatpush.bf16.xpose.msra.mxu0 0
          %1150 = vmatpush.bf16.xpose.msra.mxu0 0
          %1151 = vmatpush.bf16.xpose.msra.mxu0 0
          %1152 = vmatpush.bf16.xpose.msra.mxu0 0
          %1153 = vmatpush.bf16.xpose.msra.mxu0 0
          %1154 = vmatpush.bf16.xpose.msra.mxu0 %v1145
          %1155 = vmatmul.bf16.gmra.mxu0 %v1142
          %v1156 = vpop.f32.mrf.mxu0
          %v1157 = vadd.f32 0.0, %v1156
          %v1158 = vpop.f32.mrf.mxu0
          %1159 = vdwg.mxu0
          %v1160 = vsel %vm961, -1e+09, %v1157
          %v1161 = vsel %vm710, %v1160, -inf
          %1162 = vmax.xlane.f32.xlu0 %v1161
          %v1163 = vpop.xlane.xlu0 %1162
          %v1164 = vsub.f32 %v1160, %v1163
          %v1165 = vmul.f32 %v1164, 1.442695
          %v1166 = vpow.pop %v1165
          %v1167 = vsel %vm710, %v1166, 0.0
          %1168 = vadd.xlane.f32.xlu0 %v1167
          %v1169 = vpop.xlane.xlu0 %1168
          %v1170 = vrcp.pop %v1169
          %v1171 = vmul.f32 %v1166, %v1170
          %v1172 = vpack.c.bf16 %v1171, %v1171
          %1173 = vrot.lane.b32.xlu0 %v964, 40
          %v1174 = vpop.permute.xlu0 %1173
          %v1176 = vsel %vm710, %v1172, 0
          %v1179 = vsel %vm748, %v1174, 0
          %1181 = vmatpush.bf16.msra.mxu0 0
          %1182 = vmatpush.bf16.msra.mxu0 0
          %1183 = vmatpush.bf16.msra.mxu0 0
          %1184 = vmatpush.bf16.msra.mxu0 0
          %1185 = vmatpush.bf16.msra.mxu0 0
          %1186 = vmatpush.bf16.msra.mxu0 0
          %1187 = vmatpush.bf16.msra.mxu0 0
          %1188 = vmatpush.bf16.msra.mxu0 %v1179
          %1189 = vmatmul.bf16.gmra.mxu0 %v1176
          %v1190 = vpop.f32.mrf.mxu0
          %v1191 = vadd.f32 0.0, %v1190
          %v1192 = vpop.f32.mrf.mxu0
          %1193 = vdwg.mxu0
          %1195 = vrot.lane.b32.xlu0 %v1077, 8
          %v1196 = vpop.permute.xlu0 %1195
          %1199 = vrot.lane.b32.xlu0 %v1134, 16
          %v1200 = vpop.permute.xlu0 %1199
          %1203 = vrot.lane.b32.xlu0 %v1191, 24
          %v1204 = vpop.permute.xlu0 %1203
          %v1206 = vsel %vm710, %v1017, %v1196
          %v1207 = vsel %vm952, %v1206, %v1200
          %v1208 = vsel %vm954, %v1207, %v1204
          %v1209 = vpack.c.bf16 %v1208, %v955
          %v1210 = vld [vmem:[%s6] sm:$0xf]
          %v1211 = vld [vmem:[%s6 + $0x4] sm:$0xf]
          %v1212 = vld [vmem:[%s6 + $0x8] sm:$0xf]
          %v1213 = vld [vmem:[%s6 + $0xc] sm:$0xf]
          %v1214 = vld [vmem:[%s7] sm:$0x1]
          %v1216 = vperm.slane %v1214, 0
          %v1222 = vunpack.c.l.b16 %v1210
          %v1223 = vunpack.c.l.b16 %v1211
          %v1224 = vunpack.c.l.b16 %v1212
          %v1225 = vunpack.c.l.b16 %v1213
          %v1226 = vpack.c.b16 %v1223, %v1222
          %v1227 = vpack.c.b16 %v1225, %v1224
          %v1231 = vsel %vm555, %v1209, 0
          %1233 = vmatpush.bf16.msra.mxu0 0
          %1234 = vmatpush.bf16.msra.mxu0 0
          %1235 = vmatpush.bf16.msra.mxu0 0
          %1236 = vmatpush.bf16.msra.mxu0 0
          %1237 = vmatpush.bf16.msra.mxu0 0
          %1238 = vmatpush.bf16.msra.mxu0 0
          %1239 = vmatpush.bf16.msra.mxu0 %v1227
          %1240 = vmatpush.bf16.msra.mxu0 %v1226
          %1241 = vmatmul.bf16.gmra.mxu0 %v1231
          %v1242 = vpop.f32.mrf.mxu0
          %v1243 = vadd.f32 %v1216, %v1242
          %v1244 = vpop.f32.mrf.mxu0
          %v1245 = vadd.f32 %v1216, %v1244
          %1246 = vdwg.mxu0
          %v1247 = vadd.f32 %v551, %v1243
          %v1248 = vadd.f32 %v552, %v1245
          %v1249 = vld [vmem:[%s13] sm:$0x1]
          %v1251 = vperm.slane %v1249, 0
          %v1253 = vadd.f32 %v1247, %v1251
          %v1254 = vadd.f32 %v1248, %v1251
          %1255 = vst.msk [vmem:[#allocation3] sm:$0xff] %vm555, %v1253
          %1256 = vst.msk [vmem:[#allocation3 + $0x8] sm:$0xff] %vm555, %v1254
          %v1257 = vld [vmem:[%s8] sm:$0x1]
          %v1258 = vld [vmem:[%s9] sm:$0x1]
          %v1259 = vsel %vm555, %v1247, 0.0
          %1260 = vadd.xlane.f32.xlu0 %v1259
          %v1261 = vpop.xlane.xlu0 %1260
          %v1262 = vsel %vm555, %v1248, 0.0
          %1263 = vadd.xlane.f32.xlu0 %v1262
          %v1264 = vpop.xlane.xlu0 %1263
          %v1265 = vmul.f32 %v1261, %v568
          %v1266 = vmul.f32 %v1264, %v568
          %v1267 = vsub.f32 %v1247, %v1265
          %v1268 = vsub.f32 %v1248, %v1266
          %v1269 = vmul.f32 %v1267, %v1267
          %v1270 = vmul.f32 %v1268, %v1268
          %v1271 = vsel %vm555, %v1269, 0.0
          %1272 = vadd.xlane.f32.xlu0 %v1271
          %v1273 = vpop.xlane.xlu0 %1272
          %v1274 = vsel %vm555, %v1270, 0.0
          %1275 = vadd.xlane.f32.xlu0 %v1274
          %v1276 = vpop.xlane.xlu0 %1275
          %v1277 = vmul.f32 %v1273, %v587
          %v1278 = vmul.f32 %v1276, %v587
          %v1280 = vperm.slane %v1257, 0
          %v1282 = vmul.f32 %v1280, %v1267
          %v1283 = vmul.f32 %v1280, %v1268
          %v1284 = vrsqrt.pop %v1277
          %v1285 = vmul.f32 %v1284, %v1277
          %v1286 = vmul.f32 %v1285, %v1284
          %v1287 = vmul.f32 0.5, %v1286
          %v1288 = vsub.f32 1.5, %v1287
          %v1289 = vmul.f32 %v1284, %v1288
          %v1290 = vmul.f32 %v1277, %v1289
          %vm1291 = vcmp.eq.f32.partialorder %v1277, inf
          %v1292 = vsel %vm1291, %v1277, %v1290
          %vm1293 = vcmp.eq.f32.partialorder %v1277, 0.0
          %v1294 = vand.u32 %v1277, 2147483648
          %v1295 = vsel %vm1293, %v1294, %v1292
          %v1296 = vrsqrt.pop %v1278
          %v1297 = vmul.f32 %v1296, %v1278
          %v1298 = vmul.f32 %v1297, %v1296
          %v1299 = vmul.f32 0.5, %v1298
          %v1300 = vsub.f32 1.5, %v1299
          %v1301 = vmul.f32 %v1296, %v1300
          %v1302 = vmul.f32 %v1278, %v1301
          %vm1303 = vcmp.eq.f32.partialorder %v1278, inf
          %v1304 = vsel %vm1303, %v1278, %v1302
          %vm1305 = vcmp.eq.f32.partialorder %v1278, 0.0
          %v1306 = vand.u32 %v1278, 2147483648
          %v1307 = vsel %vm1305, %v1306, %v1304
          %v1308 = vadd.f32 %v1295, 1e-06
          %v1309 = vadd.f32 %v1307, 1e-06
          %v1310 = vrcp.pop %v1308
          %v1311 = vmul.f32 %v1308, %v1310
          %v1312 = vsub.f32 1.0, %v1311
          %v1313 = vmul.f32 %v1310, %v1312
          %v1314 = vadd.f32 %v1310, %v1313
          %vm1315 = vweird.f32 %v1308
          %vm1316 = vweird.f32 %v1310
          %vm1317 = vmor %vm1315, %vm1316
          %v1318 = vsel %vm1317, %v1310, %v1314
          %v1319 = vand.u32 2147483647, %v1308
          %vm1320 = vcmp.eq.f32.partialorder %v1319, 8.507059e+37
          %v1321 = vand.u32 %v1308, 2147483648
          %v1322 = vor.u32 1.1754944e-38, %v1321
          %v1323 = vsel %vm1320, %v1322, %v1318
          %v1324 = vmul.f32 %v1282, %v1323
          %v1325 = vrcp.pop %v1309
          %v1326 = vmul.f32 %v1309, %v1325
          %v1327 = vsub.f32 1.0, %v1326
          %v1328 = vmul.f32 %v1325, %v1327
          %v1329 = vadd.f32 %v1325, %v1328
          %vm1330 = vweird.f32 %v1309
          %vm1331 = vweird.f32 %v1325
          %vm1332 = vmor %vm1330, %vm1331
          %v1333 = vsel %vm1332, %v1325, %v1329
          %v1334 = vand.u32 2147483647, %v1309
          %vm1335 = vcmp.eq.f32.partialorder %v1334, 8.507059e+37
          %v1336 = vand.u32 %v1309, 2147483648
          %v1337 = vor.u32 1.1754944e-38, %v1336
          %v1338 = vsel %vm1335, %v1337, %v1333
          %v1339 = vmul.f32 %v1283, %v1338
          %v1341 = vperm.slane %v1258, 0
          %v1343 = vadd.f32 %v1324, %v1341
          %v1344 = vadd.f32 %v1339, %v1341
          %v1345 = vpack.c.bf16 %v1343, %v1343
          %v1346 = vpack.c.bf16 %v1344, %v1344
          %vm1347 = vcmask 257024
          %1348 = vst.msk [vmem:[#allocation2] sm:$0xf] %vm1347, %v1345
          %1349 = vst.msk [vmem:[#allocation2 + $0x4] sm:$0xf] %vm1347, %v1346
        $region103: #{tpu_custom_call.1} parent=94 // pred_fallthru
          _
        %v1350 = vld [vmem:[#allocation2] sm:$0xf]
        %v1351 = vld [vmem:[#allocation2 + $0x4] sm:$0xf]
        %v1352 = vld [vmem:[%s487] sm:$0xff]
        %v1353 = vld [vmem:[%s487 + $0x8] sm:$0xff]
        %v1354 = vld [vmem:[%s487 + $0x10] sm:$0xff]
        %v1355 = vld [vmem:[%s487 + $0x18] sm:$0xff]
        %v1356 = vld [vmem:[%s487 + $0x20] sm:$0xff]
        %v1357 = vld [vmem:[%s487 + $0x28] sm:$0xff]
        %v1358 = vld [vmem:[%s487 + $0x30] sm:$0xff]
        %v1359 = vld [vmem:[%s487 + $0x38] sm:$0xff]
        %v1360 = vld [vmem:[%s487 + $0x40] sm:$0xff]
        %v1361 = vld [vmem:[%s487 + $0x48] sm:$0xff]
        %v1362 = vld [vmem:[%s487 + $0x50] sm:$0xff]
        %v1363 = vld [vmem:[%s487 + $0x58] sm:$0xff]
        %v1364 = vld [vmem:[%s487 + $0x60] sm:$0xff]
        %v1365 = vld [vmem:[%s487 + $0x68] sm:$0xff]
        %v1366 = vld [vmem:[%s487 + $0x70] sm:$0xff]
        %v1367 = vld [vmem:[%s487 + $0x78] sm:$0xff]
        %v1368 = vld [vmem:[%s538] sm:$0xff]
        %v1370 = vperm.slane %v1368, 0
        %v1371 = vperm.slane %v1368, 1
        %v1372 = vperm.slane %v1368, 2
        %v1373 = vperm.slane %v1368, 3
        %v1374 = vperm.slane %v1368, 4
        %v1375 = vperm.slane %v1368, 5
        %v1376 = vperm.slane %v1368, 6
        %v1377 = vperm.slane %v1368, 7
        %v1388 = vunpack.c.l.b16 %v1350
        %v1389 = vunpack.c.l.b16 %v1351
        %v1390 = vpack.c.b16 %v1389, %v1388
        %v1407 = vunpack.c.l.b16 %v1352
        %v1408 = vunpack.c.h.b16 %v1352
        %v1409 = vunpack.c.l.b16 %v1353
        %v1410 = vunpack.c.h.b16 %v1353
        %v1411 = vunpack.c.l.b16 %v1354
        %v1412 = vunpack.c.h.b16 %v1354
        %v1413 = vunpack.c.l.b16 %v1355
        %v1414 = vunpack.c.h.b16 %v1355
        %v1415 = vunpack.c.l.b16 %v1356
        %v1416 = vunpack.c.h.b16 %v1356
        %v1417 = vunpack.c.l.b16 %v1357
        %v1418 = vunpack.c.h.b16 %v1357
        %v1419 = vunpack.c.l.b16 %v1358
        %v1420 = vunpack.c.h.b16 %v1358
        %v1421 = vunpack.c.l.b16 %v1359
        %v1422 = vunpack.c.h.b16 %v1359
        %v1423 = vunpack.c.l.b16 %v1360
        %v1424 = vunpack.c.h.b16 %v1360
        %v1425 = vunpack.c.l.b16 %v1361
        %v1426 = vunpack.c.h.b16 %v1361
        %v1427 = vunpack.c.l.b16 %v1362
        %v1428 = vunpack.c.h.b16 %v1362
        %v1429 = vunpack.c.l.b16 %v1363
        %v1430 = vunpack.c.h.b16 %v1363
        %v1431 = vunpack.c.l.b16 %v1364
        %v1432 = vunpack.c.h.b16 %v1364
        %v1433 = vunpack.c.l.b16 %v1365
        %v1434 = vunpack.c.h.b16 %v1365
        %v1435 = vunpack.c.l.b16 %v1366
        %v1436 = vunpack.c.h.b16 %v1366
        %v1437 = vunpack.c.l.b16 %v1367
        %v1438 = vunpack.c.h.b16 %v1367
        %v1439 = vpack.c.b16 %v1415, %v1407
        %v1440 = vpack.c.b16 %v1416, %v1408
        %v1441 = vpack.c.b16 %v1417, %v1409
        %v1442 = vpack.c.b16 %v1418, %v1410
        %v1443 = vpack.c.b16 %v1419, %v1411
        %v1444 = vpack.c.b16 %v1420, %v1412
        %v1445 = vpack.c.b16 %v1421, %v1413
        %v1446 = vpack.c.b16 %v1422, %v1414
        %v1447 = vpack.c.b16 %v1431, %v1423
        %v1448 = vpack.c.b16 %v1432, %v1424
        %v1449 = vpack.c.b16 %v1433, %v1425
        %v1450 = vpack.c.b16 %v1434, %v1426
        %v1451 = vpack.c.b16 %v1435, %v1427
        %v1452 = vpack.c.b16 %v1436, %v1428
        %v1453 = vpack.c.b16 %v1437, %v1429
        %v1454 = vpack.c.b16 %v1438, %v1430
        %vm1471 = vcmask 261120
        %v1473 = vsel %vm1471, %v1390, 0
        %1475 = vmatpush.bf16.msra.mxu0 0
        %1476 = vmatpush.bf16.msra.mxu0 0
        %1477 = vmatpush.bf16.msra.mxu0 0
        %1478 = vmatpush.bf16.msra.mxu0 0
        %1479 = vmatpush.bf16.msra.mxu0 0
        %1480 = vmatpush.bf16.msra.mxu0 0
        %1481 = vmatpush.bf16.msra.mxu0 %v1447
        %1482 = vmatpush.bf16.msra.mxu0 %v1439
        %1483 = vmatmul.bf16.gmra.mxu0 %v1473
        %v1484 = vpop.f32.mrf.mxu0
        %v1485 = vadd.f32 %v1370, %v1484
        %v1486 = vpop.f32.mrf.mxu0
        %v1487 = vadd.f32 %v1370, %v1486
        %1488 = vdwg.mxu0
        %1489 = vmatpush.bf16.msra.mxu0 0
        %1490 = vmatpush.bf16.msra.mxu0 0
        %1491 = vmatpush.bf16.msra.mxu0 0
        %1492 = vmatpush.bf16.msra.mxu0 0
        %1493 = vmatpush.bf16.msra.mxu0 0
        %1494 = vmatpush.bf16.msra.mxu0 0
        %1495 = vmatpush.bf16.msra.mxu0 %v1448
        %1496 = vmatpush.bf16.msra.mxu0 %v1440
        %1497 = vmatmul.bf16.gmra.mxu0 %v1473
        %v1498 = vpop.f32.mrf.mxu0
        %v1499 = vadd.f32 %v1371, %v1498
        %v1500 = vpop.f32.mrf.mxu0
        %v1501 = vadd.f32 %v1371, %v1500
        %1502 = vdwg.mxu0
        %1503 = vmatpush.bf16.msra.mxu0 0
        %1504 = vmatpush.bf16.msra.mxu0 0
        %1505 = vmatpush.bf16.msra.mxu0 0
        %1506 = vmatpush.bf16.msra.mxu0 0
        %1507 = vmatpush.bf16.msra.mxu0 0
        %1508 = vmatpush.bf16.msra.mxu0 0
        %1509 = vmatpush.bf16.msra.mxu0 %v1449
        %1510 = vmatpush.bf16.msra.mxu0 %v1441
        %1511 = vmatmul.bf16.gmra.mxu0 %v1473
        %v1512 = vpop.f32.mrf.mxu0
        %v1513 = vadd.f32 %v1372, %v1512
        %v1514 = vpop.f32.mrf.mxu0
        %v1515 = vadd.f32 %v1372, %v1514
        %1516 = vdwg.mxu0
        %1517 = vmatpush.bf16.msra.mxu0 0
        %1518 = vmatpush.bf16.msra.mxu0 0
        %1519 = vmatpush.bf16.msra.mxu0 0
        %1520 = vmatpush.bf16.msra.mxu0 0
        %1521 = vmatpush.bf16.msra.mxu0 0
        %1522 = vmatpush.bf16.msra.mxu0 0
        %1523 = vmatpush.bf16.msra.mxu0 %v1450
        %1524 = vmatpush.bf16.msra.mxu0 %v1442
        %1525 = vmatmul.bf16.gmra.mxu0 %v1473
        %v1526 = vpop.f32.mrf.mxu0
        %v1527 = vadd.f32 %v1373, %v1526
        %v1528 = vpop.f32.mrf.mxu0
        %v1529 = vadd.f32 %v1373, %v1528
        %1530 = vdwg.mxu0
        %1531 = vmatpush.bf16.msra.mxu0 0
        %1532 = vmatpush.bf16.msra.mxu0 0
        %1533 = vmatpush.bf16.msra.mxu0 0
        %1534 = vmatpush.bf16.msra.mxu0 0
        %1535 = vmatpush.bf16.msra.mxu0 0
        %1536 = vmatpush.bf16.msra.mxu0 0
        %1537 = vmatpush.bf16.msra.mxu0 %v1451
        %1538 = vmatpush.bf16.msra.mxu0 %v1443
        %1539 = vmatmul.bf16.gmra.mxu0 %v1473
        %v1540 = vpop.f32.mrf.mxu0
        %v1541 = vadd.f32 %v1374, %v1540
        %v1542 = vpop.f32.mrf.mxu0
        %v1543 = vadd.f32 %v1374, %v1542
        %1544 = vdwg.mxu0
        %1545 = vmatpush.bf16.msra.mxu0 0
        %1546 = vmatpush.bf16.msra.mxu0 0
        %1547 = vmatpush.bf16.msra.mxu0 0
        %1548 = vmatpush.bf16.msra.mxu0 0
        %1549 = vmatpush.bf16.msra.mxu0 0
        %1550 = vmatpush.bf16.msra.mxu0 0
        %1551 = vmatpush.bf16.msra.mxu0 %v1452
        %1552 = vmatpush.bf16.msra.mxu0 %v1444
        %1553 = vmatmul.bf16.gmra.mxu0 %v1473
        %v1554 = vpop.f32.mrf.mxu0
        %v1555 = vadd.f32 %v1375, %v1554
        %v1556 = vpop.f32.mrf.mxu0
        %v1557 = vadd.f32 %v1375, %v1556
        %1558 = vdwg.mxu0
        %1559 = vmatpush.bf16.msra.mxu0 0
        %1560 = vmatpush.bf16.msra.mxu0 0
        %1561 = vmatpush.bf16.msra.mxu0 0
        %1562 = vmatpush.bf16.msra.mxu0 0
        %1563 = vmatpush.bf16.msra.mxu0 0
        %1564 = vmatpush.bf16.msra.mxu0 0
        %1565 = vmatpush.bf16.msra.mxu0 %v1453
        %1566 = vmatpush.bf16.msra.mxu0 %v1445
        %1567 = vmatmul.bf16.gmra.mxu0 %v1473
        %v1568 = vpop.f32.mrf.mxu0
        %v1569 = vadd.f32 %v1376, %v1568
        %v1570 = vpop.f32.mrf.mxu0
        %v1571 = vadd.f32 %v1376, %v1570
        %1572 = vdwg.mxu0
        %1573 = vmatpush.bf16.msra.mxu0 0
        %1574 = vmatpush.bf16.msra.mxu0 0
        %1575 = vmatpush.bf16.msra.mxu0 0
        %1576 = vmatpush.bf16.msra.mxu0 0
        %1577 = vmatpush.bf16.msra.mxu0 0
        %1578 = vmatpush.bf16.msra.mxu0 0
        %1579 = vmatpush.bf16.msra.mxu0 %v1454
        %1580 = vmatpush.bf16.msra.mxu0 %v1446
        %1581 = vmatmul.bf16.gmra.mxu0 %v1473
        %v1582 = vpop.f32.mrf.mxu0
        %v1583 = vadd.f32 %v1377, %v1582
        %v1584 = vpop.f32.mrf.mxu0
        %v1585 = vadd.f32 %v1377, %v1584
        %1586 = vdwg.mxu0
        %v1587 = vmax.f32 %v1485, 0.0
        %v1588 = vmax.f32 %v1499, 0.0
        %v1589 = vmax.f32 %v1513, 0.0
        %v1590 = vmax.f32 %v1527, 0.0
        %v1591 = vmax.f32 %v1541, 0.0
        %v1592 = vmax.f32 %v1555, 0.0
        %v1593 = vmax.f32 %v1569, 0.0
        %v1594 = vmax.f32 %v1583, 0.0
        %v1595 = vmax.f32 %v1487, 0.0
        %v1596 = vmax.f32 %v1501, 0.0
        %v1597 = vmax.f32 %v1515, 0.0
        %v1598 = vmax.f32 %v1529, 0.0
        %v1599 = vmax.f32 %v1543, 0.0
        %v1600 = vmax.f32 %v1557, 0.0
        %v1601 = vmax.f32 %v1571, 0.0
        %v1602 = vmax.f32 %v1585, 0.0
        %v1603 = vld [vmem:[#allocation3] sm:$0xff]
        %v1604 = vld [vmem:[#allocation3 + $0x8] sm:$0xff]
        %v1605 = vpack.c.bf16 %v1595, %v1587
        %v1606 = vpack.c.bf16 %v1596, %v1588
        %v1607 = vpack.c.bf16 %v1597, %v1589
        %v1608 = vpack.c.bf16 %v1598, %v1590
        %v1609 = vpack.c.bf16 %v1599, %v1591
        %v1610 = vpack.c.bf16 %v1600, %v1592
        %v1611 = vpack.c.bf16 %v1601, %v1593
        %v1612 = vpack.c.bf16 %v1602, %v1594
        %v1613 = vld [vmem:[%s544] sm:$0xf]
        %v1614 = vld [vmem:[%s544 + $0x4] sm:$0xf]
        %v1615 = vld [vmem:[%s544 + $0x8] sm:$0xf]
        %v1616 = vld [vmem:[%s544 + $0xc] sm:$0xf]
        %v1617 = vld [vmem:[%s544 + $0x10] sm:$0xf]
        %v1618 = vld [vmem:[%s544 + $0x14] sm:$0xf]
        %v1619 = vld [vmem:[%s544 + $0x18] sm:$0xf]
        %v1620 = vld [vmem:[%s544 + $0x1c] sm:$0xf]
        %v1621 = vld [vmem:[%s544 + $0x20] sm:$0xf]
        %v1622 = vld [vmem:[%s544 + $0x24] sm:$0xf]
        %v1623 = vld [vmem:[%s544 + $0x28] sm:$0xf]
        %v1624 = vld [vmem:[%s544 + $0x2c] sm:$0xf]
        %v1625 = vld [vmem:[%s544 + $0x30] sm:$0xf]
        %v1626 = vld [vmem:[%s544 + $0x34] sm:$0xf]
        %v1627 = vld [vmem:[%s544 + $0x38] sm:$0xf]
        %v1628 = vld [vmem:[%s544 + $0x3c] sm:$0xf]
        %v1629 = vld [vmem:[%s544 + $0x40] sm:$0xf]
        %v1630 = vld [vmem:[%s544 + $0x44] sm:$0xf]
        %v1631 = vld [vmem:[%s544 + $0x48] sm:$0xf]
        %v1632 = vld [vmem:[%s544 + $0x4c] sm:$0xf]
        %v1633 = vld [vmem:[%s544 + $0x50] sm:$0xf]
        %v1634 = vld [vmem:[%s544 + $0x54] sm:$0xf]
        %v1635 = vld [vmem:[%s544 + $0x58] sm:$0xf]
        %v1636 = vld [vmem:[%s544 + $0x5c] sm:$0xf]
        %v1637 = vld [vmem:[%s544 + $0x60] sm:$0xf]
        %v1638 = vld [vmem:[%s544 + $0x64] sm:$0xf]
        %v1639 = vld [vmem:[%s544 + $0x68] sm:$0xf]
        %v1640 = vld [vmem:[%s544 + $0x6c] sm:$0xf]
        %v1641 = vld [vmem:[%s544 + $0x70] sm:$0xf]
        %v1642 = vld [vmem:[%s544 + $0x74] sm:$0xf]
        %v1643 = vld [vmem:[%s544 + $0x78] sm:$0xf]
        %v1644 = vld [vmem:[%s544 + $0x7c] sm:$0xf]
        %v1645 = vld [vmem:[%s544 + $0x80] sm:$0xf]
        %v1646 = vld [vmem:[%s544 + $0x84] sm:$0xf]
        %v1647 = vld [vmem:[%s544 + $0x88] sm:$0xf]
        %v1648 = vld [vmem:[%s544 + $0x8c] sm:$0xf]
        %v1649 = vld [vmem:[%s544 + $0x90] sm:$0xf]
        %v1650 = vld [vmem:[%s544 + $0x94] sm:$0xf]
        %v1651 = vld [vmem:[%s544 + $0x98] sm:$0xf]
        %v1652 = vld [vmem:[%s544 + $0x9c] sm:$0xf]
        %v1653 = vld [vmem:[%s544 + $0xa0] sm:$0xf]
        %v1654 = vld [vmem:[%s544 + $0xa4] sm:$0xf]
        %v1655 = vld [vmem:[%s544 + $0xa8] sm:$0xf]
        %v1656 = vld [vmem:[%s544 + $0xac] sm:$0xf]
        %v1657 = vld [vmem:[%s544 + $0xb0] sm:$0xf]
        %v1658 = vld [vmem:[%s544 + $0xb4] sm:$0xf]
        %v1659 = vld [vmem:[%s544 + $0xb8] sm:$0xf]
        %v1660 = vld [vmem:[%s544 + $0xbc] sm:$0xf]
        %v1661 = vld [vmem:[%s544 + $0xc0] sm:$0xf]
        %v1662 = vld [vmem:[%s544 + $0xc4] sm:$0xf]
        %v1663 = vld [vmem:[%s544 + $0xc8] sm:$0xf]
        %v1664 = vld [vmem:[%s544 + $0xcc] sm:$0xf]
        %v1665 = vld [vmem:[%s544 + $0xd0] sm:$0xf]
        %v1666 = vld [vmem:[%s544 + $0xd4] sm:$0xf]
        %v1667 = vld [vmem:[%s544 + $0xd8] sm:$0xf]
        %v1668 = vld [vmem:[%s544 + $0xdc] sm:$0xf]
        %v1669 = vld [vmem:[%s544 + $0xe0] sm:$0xf]
        %v1670 = vld [vmem:[%s544 + $0xe4] sm:$0xf]
        %v1671 = vld [vmem:[%s544 + $0xe8] sm:$0xf]
        %v1672 = vld [vmem:[%s544 + $0xec] sm:$0xf]
        %v1673 = vld [vmem:[%s544 + $0xf0] sm:$0xf]
        %v1674 = vld [vmem:[%s544 + $0xf4] sm:$0xf]
        %v1675 = vld [vmem:[%s544 + $0xf8] sm:$0xf]
        %v1676 = vld [vmem:[%s544 + $0xfc] sm:$0xf]
        %v1677 = vld [vmem:[%s544 + $0x100] sm:$0xf]
        %v1678 = vld [vmem:[%s544 + $0x104] sm:$0xf]
        %v1679 = vld [vmem:[%s544 + $0x108] sm:$0xf]
        %v1680 = vld [vmem:[%s544 + $0x10c] sm:$0xf]
        %v1681 = vld [vmem:[%s544 + $0x110] sm:$0xf]
        %v1682 = vld [vmem:[%s544 + $0x114] sm:$0xf]
        %v1683 = vld [vmem:[%s544 + $0x118] sm:$0xf]
        %v1684 = vld [vmem:[%s544 + $0x11c] sm:$0xf]
        %v1685 = vld [vmem:[%s544 + $0x120] sm:$0xf]
        %v1686 = vld [vmem:[%s544 + $0x124] sm:$0xf]
        %v1687 = vld [vmem:[%s544 + $0x128] sm:$0xf]
        %v1688 = vld [vmem:[%s544 + $0x12c] sm:$0xf]
        %v1689 = vld [vmem:[%s544 + $0x130] sm:$0xf]
        %v1690 = vld [vmem:[%s544 + $0x134] sm:$0xf]
        %v1691 = vld [vmem:[%s544 + $0x138] sm:$0xf]
        %v1692 = vld [vmem:[%s544 + $0x13c] sm:$0xf]
        %v1693 = vld [vmem:[%s544 + $0x140] sm:$0xf]
        %v1694 = vld [vmem:[%s544 + $0x144] sm:$0xf]
        %v1695 = vld [vmem:[%s544 + $0x148] sm:$0xf]
        %v1696 = vld [vmem:[%s544 + $0x14c] sm:$0xf]
        %v1697 = vld [vmem:[%s544 + $0x150] sm:$0xf]
        %v1698 = vld [vmem:[%s544 + $0x154] sm:$0xf]
        %v1699 = vld [vmem:[%s544 + $0x158] sm:$0xf]
        %v1700 = vld [vmem:[%s544 + $0x15c] sm:$0xf]
        %v1701 = vld [vmem:[%s544 + $0x160] sm:$0xf]
        %v1702 = vld [vmem:[%s544 + $0x164] sm:$0xf]
        %v1703 = vld [vmem:[%s544 + $0x168] sm:$0xf]
        %v1704 = vld [vmem:[%s544 + $0x16c] sm:$0xf]
        %v1705 = vld [vmem:[%s544 + $0x170] sm:$0xf]
        %v1706 = vld [vmem:[%s544 + $0x174] sm:$0xf]
        %v1707 = vld [vmem:[%s544 + $0x178] sm:$0xf]
        %v1708 = vld [vmem:[%s544 + $0x17c] sm:$0xf]
        %v1709 = vld [vmem:[%s544 + $0x180] sm:$0xf]
        %v1710 = vld [vmem:[%s544 + $0x184] sm:$0xf]
        %v1711 = vld [vmem:[%s544 + $0x188] sm:$0xf]
        %v1712 = vld [vmem:[%s544 + $0x18c] sm:$0xf]
        %v1713 = vld [vmem:[%s544 + $0x190] sm:$0xf]
        %v1714 = vld [vmem:[%s544 + $0x194] sm:$0xf]
        %v1715 = vld [vmem:[%s544 + $0x198] sm:$0xf]
        %v1716 = vld [vmem:[%s544 + $0x19c] sm:$0xf]
        %v1717 = vld [vmem:[%s544 + $0x1a0] sm:$0xf]
        %v1718 = vld [vmem:[%s544 + $0x1a4] sm:$0xf]
        %v1719 = vld [vmem:[%s544 + $0x1a8] sm:$0xf]
        %v1720 = vld [vmem:[%s544 + $0x1ac] sm:$0xf]
        %v1721 = vld [vmem:[%s544 + $0x1b0] sm:$0xf]
        %v1722 = vld [vmem:[%s544 + $0x1b4] sm:$0xf]
        %v1723 = vld [vmem:[%s544 + $0x1b8] sm:$0xf]
        %v1724 = vld [vmem:[%s544 + $0x1bc] sm:$0xf]
        %v1725 = vld [vmem:[%s544 + $0x1c0] sm:$0xf]
        %v1726 = vld [vmem:[%s544 + $0x1c4] sm:$0xf]
        %v1727 = vld [vmem:[%s544 + $0x1c8] sm:$0xf]
        %v1728 = vld [vmem:[%s544 + $0x1cc] sm:$0xf]
        %v1729 = vld [vmem:[%s544 + $0x1d0] sm:$0xf]
        %v1730 = vld [vmem:[%s544 + $0x1d4] sm:$0xf]
        %v1731 = vld [vmem:[%s544 + $0x1d8] sm:$0xf]
        %v1732 = vld [vmem:[%s544 + $0x1dc] sm:$0xf]
        %v1733 = vld [vmem:[%s544 + $0x1e0] sm:$0xf]
        %v1734 = vld [vmem:[%s544 + $0x1e4] sm:$0xf]
        %v1735 = vld [vmem:[%s544 + $0x1e8] sm:$0xf]
        %v1736 = vld [vmem:[%s544 + $0x1ec] sm:$0xf]
        %v1737 = vld [vmem:[%s544 + $0x1f0] sm:$0xf]
        %v1738 = vld [vmem:[%s544 + $0x1f4] sm:$0xf]
        %v1739 = vld [vmem:[%s544 + $0x1f8] sm:$0xf]
        %v1740 = vld [vmem:[%s544 + $0x1fc] sm:$0xf]
        %v1869 = vunpack.c.l.b16 %v1613
        %v1870 = vunpack.c.l.b16 %v1614
        %v1871 = vunpack.c.l.b16 %v1615
        %v1872 = vunpack.c.l.b16 %v1616
        %v1873 = vunpack.c.l.b16 %v1617
        %v1874 = vunpack.c.l.b16 %v1618
        %v1875 = vunpack.c.l.b16 %v1619
        %v1876 = vunpack.c.l.b16 %v1620
        %v1877 = vunpack.c.l.b16 %v1621
        %v1878 = vunpack.c.l.b16 %v1622
        %v1879 = vunpack.c.l.b16 %v1623
        %v1880 = vunpack.c.l.b16 %v1624
        %v1881 = vunpack.c.l.b16 %v1625
        %v1882 = vunpack.c.l.b16 %v1626
        %v1883 = vunpack.c.l.b16 %v1627
        %v1884 = vunpack.c.l.b16 %v1628
        %v1885 = vunpack.c.l.b16 %v1629
        %v1886 = vunpack.c.l.b16 %v1630
        %v1887 = vunpack.c.l.b16 %v1631
        %v1888 = vunpack.c.l.b16 %v1632
        %v1889 = vunpack.c.l.b16 %v1633
        %v1890 = vunpack.c.l.b16 %v1634
        %v1891 = vunpack.c.l.b16 %v1635
        %v1892 = vunpack.c.l.b16 %v1636
        %v1893 = vunpack.c.l.b16 %v1637
        %v1894 = vunpack.c.l.b16 %v1638
        %v1895 = vunpack.c.l.b16 %v1639
        %v1896 = vunpack.c.l.b16 %v1640
        %v1897 = vunpack.c.l.b16 %v1641
        %v1898 = vunpack.c.l.b16 %v1642
        %v1899 = vunpack.c.l.b16 %v1643
        %v1900 = vunpack.c.l.b16 %v1644
        %v1901 = vunpack.c.l.b16 %v1645
        %v1902 = vunpack.c.l.b16 %v1646
        %v1903 = vunpack.c.l.b16 %v1647
        %v1904 = vunpack.c.l.b16 %v1648
        %v1905 = vunpack.c.l.b16 %v1649
        %v1906 = vunpack.c.l.b16 %v1650
        %v1907 = vunpack.c.l.b16 %v1651
        %v1908 = vunpack.c.l.b16 %v1652
        %v1909 = vunpack.c.l.b16 %v1653
        %v1910 = vunpack.c.l.b16 %v1654
        %v1911 = vunpack.c.l.b16 %v1655
        %v1912 = vunpack.c.l.b16 %v1656
        %v1913 = vunpack.c.l.b16 %v1657
        %v1914 = vunpack.c.l.b16 %v1658
        %v1915 = vunpack.c.l.b16 %v1659
        %v1916 = vunpack.c.l.b16 %v1660
        %v1917 = vunpack.c.l.b16 %v1661
        %v1918 = vunpack.c.l.b16 %v1662
        %v1919 = vunpack.c.l.b16 %v1663
        %v1920 = vunpack.c.l.b16 %v1664
        %v1921 = vunpack.c.l.b16 %v1665
        %v1922 = vunpack.c.l.b16 %v1666
        %v1923 = vunpack.c.l.b16 %v1667
        %v1924 = vunpack.c.l.b16 %v1668
        %v1925 = vunpack.c.l.b16 %v1669
        %v1926 = vunpack.c.l.b16 %v1670
        %v1927 = vunpack.c.l.b16 %v1671
        %v1928 = vunpack.c.l.b16 %v1672
        %v1929 = vunpack.c.l.b16 %v1673
        %v1930 = vunpack.c.l.b16 %v1674
        %v1931 = vunpack.c.l.b16 %v1675
        %v1932 = vunpack.c.l.b16 %v1676
        %v1933 = vunpack.c.l.b16 %v1677
        %v1934 = vunpack.c.l.b16 %v1678
        %v1935 = vunpack.c.l.b16 %v1679
        %v1936 = vunpack.c.l.b16 %v1680
        %v1937 = vunpack.c.l.b16 %v1681
        %v1938 = vunpack.c.l.b16 %v1682
        %v1939 = vunpack.c.l.b16 %v1683
        %v1940 = vunpack.c.l.b16 %v1684
        %v1941 = vunpack.c.l.b16 %v1685
        %v1942 = vunpack.c.l.b16 %v1686
        %v1943 = vunpack.c.l.b16 %v1687
        %v1944 = vunpack.c.l.b16 %v1688
        %v1945 = vunpack.c.l.b16 %v1689
        %v1946 = vunpack.c.l.b16 %v1690
        %v1947 = vunpack.c.l.b16 %v1691
        %v1948 = vunpack.c.l.b16 %v1692
        %v1949 = vunpack.c.l.b16 %v1693
        %v1950 = vunpack.c.l.b16 %v1694
        %v1951 = vunpack.c.l.b16 %v1695
        %v1952 = vunpack.c.l.b16 %v1696
        %v1953 = vunpack.c.l.b16 %v1697
        %v1954 = vunpack.c.l.b16 %v1698
        %v1955 = vunpack.c.l.b16 %v1699
        %v1956 = vunpack.c.l.b16 %v1700
        %v1957 = vunpack.c.l.b16 %v1701
        %v1958 = vunpack.c.l.b16 %v1702
        %v1959 = vunpack.c.l.b16 %v1703
        %v1960 = vunpack.c.l.b16 %v1704
        %v1961 = vunpack.c.l.b16 %v1705
        %v1962 = vunpack.c.l.b16 %v1706
        %v1963 = vunpack.c.l.b16 %v1707
        %v1964 = vunpack.c.l.b16 %v1708
        %v1965 = vunpack.c.l.b16 %v1709
        %v1966 = vunpack.c.l.b16 %v1710
        %v1967 = vunpack.c.l.b16 %v1711
        %v1968 = vunpack.c.l.b16 %v1712
        %v1969 = vunpack.c.l.b16 %v1713
        %v1970 = vunpack.c.l.b16 %v1714
        %v1971 = vunpack.c.l.b16 %v1715
        %v1972 = vunpack.c.l.b16 %v1716
        %v1973 = vunpack.c.l.b16 %v1717
        %v1974 = vunpack.c.l.b16 %v1718
        %v1975 = vunpack.c.l.b16 %v1719
        %v1976 = vunpack.c.l.b16 %v1720
        %v1977 = vunpack.c.l.b16 %v1721
        %v1978 = vunpack.c.l.b16 %v1722
        %v1979 = vunpack.c.l.b16 %v1723
        %v1980 = vunpack.c.l.b16 %v1724
        %v1981 = vunpack.c.l.b16 %v1725
        %v1982 = vunpack.c.l.b16 %v1726
        %v1983 = vunpack.c.l.b16 %v1727
        %v1984 = vunpack.c.l.b16 %v1728
        %v1985 = vunpack.c.l.b16 %v1729
        %v1986 = vunpack.c.l.b16 %v1730
        %v1987 = vunpack.c.l.b16 %v1731
        %v1988 = vunpack.c.l.b16 %v1732
        %v1989 = vunpack.c.l.b16 %v1733
        %v1990 = vunpack.c.l.b16 %v1734
        %v1991 = vunpack.c.l.b16 %v1735
        %v1992 = vunpack.c.l.b16 %v1736
        %v1993 = vunpack.c.l.b16 %v1737
        %v1994 = vunpack.c.l.b16 %v1738
        %v1995 = vunpack.c.l.b16 %v1739
        %v1996 = vunpack.c.l.b16 %v1740
        %v1997 = vpack.c.b16 %v1870, %v1869
        %v1998 = vpack.c.b16 %v1872, %v1871
        %v1999 = vpack.c.b16 %v1874, %v1873
        %v2000 = vpack.c.b16 %v1876, %v1875
        %v2001 = vpack.c.b16 %v1878, %v1877
        %v2002 = vpack.c.b16 %v1880, %v1879
        %v2003 = vpack.c.b16 %v1882, %v1881
        %v2004 = vpack.c.b16 %v1884, %v1883
        %v2005 = vpack.c.b16 %v1886, %v1885
        %v2006 = vpack.c.b16 %v1888, %v1887
        %v2007 = vpack.c.b16 %v1890, %v1889
        %v2008 = vpack.c.b16 %v1892, %v1891
        %v2009 = vpack.c.b16 %v1894, %v1893
        %v2010 = vpack.c.b16 %v1896, %v1895
        %v2011 = vpack.c.b16 %v1898, %v1897
        %v2012 = vpack.c.b16 %v1900, %v1899
        %v2013 = vpack.c.b16 %v1902, %v1901
        %v2014 = vpack.c.b16 %v1904, %v1903
        %v2015 = vpack.c.b16 %v1906, %v1905
        %v2016 = vpack.c.b16 %v1908, %v1907
        %v2017 = vpack.c.b16 %v1910, %v1909
        %v2018 = vpack.c.b16 %v1912, %v1911
        %v2019 = vpack.c.b16 %v1914, %v1913
        %v2020 = vpack.c.b16 %v1916, %v1915
        %v2021 = vpack.c.b16 %v1918, %v1917
        %v2022 = vpack.c.b16 %v1920, %v1919
        %v2023 = vpack.c.b16 %v1922, %v1921
        %v2024 = vpack.c.b16 %v1924, %v1923
        %v2025 = vpack.c.b16 %v1926, %v1925
        %v2026 = vpack.c.b16 %v1928, %v1927
        %v2027 = vpack.c.b16 %v1930, %v1929
        %v2028 = vpack.c.b16 %v1932, %v1931
        %v2029 = vpack.c.b16 %v1934, %v1933
        %v2030 = vpack.c.b16 %v1936, %v1935
        %v2031 = vpack.c.b16 %v1938, %v1937
        %v2032 = vpack.c.b16 %v1940, %v1939
        %v2033 = vpack.c.b16 %v1942, %v1941
        %v2034 = vpack.c.b16 %v1944, %v1943
        %v2035 = vpack.c.b16 %v1946, %v1945
        %v2036 = vpack.c.b16 %v1948, %v1947
        %v2037 = vpack.c.b16 %v1950, %v1949
        %v2038 = vpack.c.b16 %v1952, %v1951
        %v2039 = vpack.c.b16 %v1954, %v1953
        %v2040 = vpack.c.b16 %v1956, %v1955
        %v2041 = vpack.c.b16 %v1958, %v1957
        %v2042 = vpack.c.b16 %v1960, %v1959
        %v2043 = vpack.c.b16 %v1962, %v1961
        %v2044 = vpack.c.b16 %v1964, %v1963
        %v2045 = vpack.c.b16 %v1966, %v1965
        %v2046 = vpack.c.b16 %v1968, %v1967
        %v2047 = vpack.c.b16 %v1970, %v1969
        %v2048 = vpack.c.b16 %v1972, %v1971
        %v2049 = vpack.c.b16 %v1974, %v1973
        %v2050 = vpack.c.b16 %v1976, %v1975
        %v2051 = vpack.c.b16 %v1978, %v1977
        %v2052 = vpack.c.b16 %v1980, %v1979
        %v2053 = vpack.c.b16 %v1982, %v1981
        %v2054 = vpack.c.b16 %v1984, %v1983
        %v2055 = vpack.c.b16 %v1986, %v1985
        %v2056 = vpack.c.b16 %v1988, %v1987
        %v2057 = vpack.c.b16 %v1990, %v1989
        %v2058 = vpack.c.b16 %v1992, %v1991
        %v2059 = vpack.c.b16 %v1994, %v1993
        %v2060 = vpack.c.b16 %v1996, %v1995
        %2125 = vmatpush.bf16.msra.mxu0 %v2004
        %2126 = vmatpush.bf16.msra.mxu0 %v2003
        %2127 = vmatpush.bf16.msra.mxu0 %v2002
        %2128 = vmatpush.bf16.msra.mxu0 %v2001
        %2129 = vmatpush.bf16.msra.mxu0 %v2000
        %2130 = vmatpush.bf16.msra.mxu0 %v1999
        %2131 = vmatpush.bf16.msra.mxu0 %v1998
        %2132 = vmatpush.bf16.msra.mxu0 %v1997
        %2133 = vmatmul.bf16.gmra.mxu0 %v1605
        %v2134 = vpop.f32.mrf.mxu0
        %v2135 = vadd.f32 0.0, %v2134
        %v2136 = vpop.f32.mrf.mxu0
        %v2137 = vadd.f32 0.0, %v2136
        %2138 = vdwg.mxu0
        %2139 = vmatpush.bf16.msra.mxu0 %v2012
        %2140 = vmatpush.bf16.msra.mxu0 %v2011
        %2141 = vmatpush.bf16.msra.mxu0 %v2010
        %2142 = vmatpush.bf16.msra.mxu0 %v2009
        %2143 = vmatpush.bf16.msra.mxu0 %v2008
        %2144 = vmatpush.bf16.msra.mxu0 %v2007
        %2145 = vmatpush.bf16.msra.mxu0 %v2006
        %2146 = vmatpush.bf16.msra.mxu0 %v2005
        %2147 = vmatmul.bf16.gmra.mxu0 %v1606
        %v2148 = vpop.f32.mrf.mxu0
        %v2149 = vadd.f32 %v2135, %v2148
        %v2150 = vpop.f32.mrf.mxu0
        %v2151 = vadd.f32 %v2137, %v2150
        %2152 = vdwg.mxu0
        %2153 = vmatpush.bf16.msra.mxu0 %v2020
        %2154 = vmatpush.bf16.msra.mxu0 %v2019
        %2155 = vmatpush.bf16.msra.mxu0 %v2018
        %2156 = vmatpush.bf16.msra.mxu0 %v2017
        %2157 = vmatpush.bf16.msra.mxu0 %v2016
        %2158 = vmatpush.bf16.msra.mxu0 %v2015
        %2159 = vmatpush.bf16.msra.mxu0 %v2014
        %2160 = vmatpush.bf16.msra.mxu0 %v2013
        %2161 = vmatmul.bf16.gmra.mxu0 %v1607
        %v2162 = vpop.f32.mrf.mxu0
        %v2163 = vadd.f32 %v2149, %v2162
        %v2164 = vpop.f32.mrf.mxu0
        %v2165 = vadd.f32 %v2151, %v2164
        %2166 = vdwg.mxu0
        %2167 = vmatpush.bf16.msra.mxu0 %v2028
        %2168 = vmatpush.bf16.msra.mxu0 %v2027
        %2169 = vmatpush.bf16.msra.mxu0 %v2026
        %2170 = vmatpush.bf16.msra.mxu0 %v2025
        %2171 = vmatpush.bf16.msra.mxu0 %v2024
        %2172 = vmatpush.bf16.msra.mxu0 %v2023
        %2173 = vmatpush.bf16.msra.mxu0 %v2022
        %2174 = vmatpush.bf16.msra.mxu0 %v2021
        %2175 = vmatmul.bf16.gmra.mxu0 %v1608
        %v2176 = vpop.f32.mrf.mxu0
        %v2177 = vadd.f32 %v2163, %v2176
        %v2178 = vpop.f32.mrf.mxu0
        %v2179 = vadd.f32 %v2165, %v2178
        %2180 = vdwg.mxu0
        %2181 = vmatpush.bf16.msra.mxu0 %v2036
        %2182 = vmatpush.bf16.msra.mxu0 %v2035
        %2183 = vmatpush.bf16.msra.mxu0 %v2034
        %2184 = vmatpush.bf16.msra.mxu0 %v2033
        %2185 = vmatpush.bf16.msra.mxu0 %v2032
        %2186 = vmatpush.bf16.msra.mxu0 %v2031
        %2187 = vmatpush.bf16.msra.mxu0 %v2030
        %2188 = vmatpush.bf16.msra.mxu0 %v2029
        %2189 = vmatmul.bf16.gmra.mxu0 %v1609
        %v2190 = vpop.f32.mrf.mxu0
        %v2191 = vadd.f32 %v2177, %v2190
        %v2192 = vpop.f32.mrf.mxu0
        %v2193 = vadd.f32 %v2179, %v2192
        %2194 = vdwg.mxu0
        %2195 = vmatpush.bf16.msra.mxu0 %v2044
        %2196 = vmatpush.bf16.msra.mxu0 %v2043
        %2197 = vmatpush.bf16.msra.mxu0 %v2042
        %2198 = vmatpush.bf16.msra.mxu0 %v2041
        %2199 = vmatpush.bf16.msra.mxu0 %v2040
        %2200 = vmatpush.bf16.msra.mxu0 %v2039
        %2201 = vmatpush.bf16.msra.mxu0 %v2038
        %2202 = vmatpush.bf16.msra.mxu0 %v2037
        %2203 = vmatmul.bf16.gmra.mxu0 %v1610
        %v2204 = vpop.f32.mrf.mxu0
        %v2205 = vadd.f32 %v2191, %v2204
        %v2206 = vpop.f32.mrf.mxu0
        %v2207 = vadd.f32 %v2193, %v2206
        %2208 = vdwg.mxu0
        %2209 = vmatpush.bf16.msra.mxu0 %v2052
        %2210 = vmatpush.bf16.msra.mxu0 %v2051
        %2211 = vmatpush.bf16.msra.mxu0 %v2050
        %2212 = vmatpush.bf16.msra.mxu0 %v2049
        %2213 = vmatpush.bf16.msra.mxu0 %v2048
        %2214 = vmatpush.bf16.msra.mxu0 %v2047
        %2215 = vmatpush.bf16.msra.mxu0 %v2046
        %2216 = vmatpush.bf16.msra.mxu0 %v2045
        %2217 = vmatmul.bf16.gmra.mxu0 %v1611
        %v2218 = vpop.f32.mrf.mxu0
        %v2219 = vadd.f32 %v2205, %v2218
        %v2220 = vpop.f32.mrf.mxu0
        %v2221 = vadd.f32 %v2207, %v2220
        %2222 = vdwg.mxu0
        %2223 = vmatpush.bf16.msra.mxu0 %v2060
        %2224 = vmatpush.bf16.msra.mxu0 %v2059
        %2225 = vmatpush.bf16.msra.mxu0 %v2058
        %2226 = vmatpush.bf16.msra.mxu0 %v2057
        %2227 = vmatpush.bf16.msra.mxu0 %v2056
        %2228 = vmatpush.bf16.msra.mxu0 %v2055
        %2229 = vmatpush.bf16.msra.mxu0 %v2054
        %2230 = vmatpush.bf16.msra.mxu0 %v2053
        %2231 = vmatmul.bf16.gmra.mxu0 %v1612
        %v2232 = vpop.f32.mrf.mxu0
        %v2233 = vadd.f32 %v2219, %v2232
        %v2234 = vpop.f32.mrf.mxu0
        %v2235 = vadd.f32 %v2221, %v2234
        %2236 = vdwg.mxu0
        %v2237 = vadd.f32 %v1603, %v2233
        %v2238 = vadd.f32 %v1604, %v2235
        %2239 = vst.msk [vmem:[#allocation3] sm:$0xff] %vm1471, %v2237
        %2240 = vst.msk [vmem:[#allocation3 + $0x8] sm:$0xff] %vm1471, %v2238
        %p2241 = scmp.eq.s32.totalorder %s26, 1
        // Predicated region
        $region104: #{tpu_custom_call.1} parent=94 // pred_check
          %p2242 = pneg %p2241
        $region105: #{tpu_custom_call.1} parent=94 // pred_check_branch
          %2244 = sbr.rel (%p2242) target = $region107
        $region106: #{tpu_custom_call.1} parent=94 // pred_region
          %v2245 = vld [vmem:[#allocation3] sm:$0xff]
          %v2246 = vld [vmem:[#allocation3 + $0x8] sm:$0xff]
          %2247 = vst.msk [vmem:[#allocation5] sm:$0xff] %vm1471, %v2245
          %2248 = vst.msk [vmem:[#allocation5 + $0x8] sm:$0xff] %vm1471, %v2246
        $region107: #{tpu_custom_call.1} parent=94 // pred_fallthru
          _
        // Predicated region
        $region108: #{tpu_custom_call.1} parent=94 // pred_check
          %p2249 = pneg %p348
        $region109: #{tpu_custom_call.1} parent=94 // pred_check_branch
          %2251 = sbr.rel (%p2249) target = $region111
        $region110: #{tpu_custom_call.1} parent=94 // pred_region
          %2253 = vsyncadd [#allocation6], 0
          %s2254 = sshll.u32 [#allocation5], 4
          %s2255 = int_to_ptr.vmem [resolvable:$true] %s2254
          %s2256 = sshll.u32 %s14, 4
          %s2257 = int_to_ptr.hbm [resolvable:$true] %s2256
          %2262 = dma.vmem_to_hbm [thread:$0]  %s2255, 256, %s2257, [#allocation6], 128, 128, 8
        $region111: #{tpu_custom_call.1} parent=94 // pred_fallthru
          _
        // Predicated region
        $region112: #{tpu_custom_call.1} parent=94 // pred_check
          %p2263 = pneg %p348
        $region113: #{tpu_custom_call.1} parent=94 // pred_check_branch
          %2265 = sbr.rel (%p2263) target = $region115
        $region114: #{tpu_custom_call.1} parent=94 // pred_region
          %2267 = dma.done [#allocation6], 256
        $region115: #{tpu_custom_call.1} parent=94 // pred_fallthru
          _
      $region95: #{tpu_custom_call.1} parent=5 // pred_fallthru
        _
      %p2268 = scmp.le.s32.totalorder 2, %s21
      // Predicated region
      $region116: #{tpu_custom_call.1} parent=5 // pred_check
        %p2269 = pneg %p2268
      $region117: #{tpu_custom_call.1} parent=5 // pred_check_branch
        %2271 = sbr.rel (%p2269) target = $region119
      $region118: #{tpu_custom_call.1} parent=5 // pred_region
        %s2272 = ssub.s32 %s21, 2
      $region119: #{tpu_custom_call.1} parent=5 // pred_fallthru
        _
    $region6: #{tpu_custom_call.1} parent=1 // loop_footer
      %s25 = sadd.s32 1, %s21
    $region7: #{tpu_custom_call.1} parent=1 // loop_footer_branch
      %20 = sbr.rel target = $region3
    $region8: #{tpu_custom_call.1} parent=1 // loop_exit
      _
    %2273 = vsyncpa [#allocation6], 1
    %s2274 = scalar_lea.sflag [#allocation6], 1
    %2275 = vsyncpa %s2274, 1

</llo_original>
